<compile_context>
chip_gen: v6e
topology: v6e:2x2x1
jax: 0.10.0
libtpu: 0.0.40
codegen_flags: <defaults>
</compile_context>

<pallas_src>
import functools
import math

import jax
import jax.numpy as jnp
from jax.experimental import pallas as pl
from jax.experimental.pallas import tpu as pltpu


def _round_up(x, m):
    return ((x + m - 1) // m) * m


def _device_kind():
    try:
        return jax.devices()[0].device_kind.lower()
    except Exception:
        return ""


def _default_num_batch_blocks():
    # v7x has 2 TensorCores per chip -> give each TC one batch block.
    kind = _device_kind()
    return 2 if ("v7" in kind or "7x" in kind) else 1


def _default_act_dtype():
    # v6e / v7x have native bf16 VPU + EUP; v5e does not (bf16 would insert converts).
    kind = _device_kind()
    if "v6" in kind or "v7" in kind or "7x" in kind:
        return jnp.bfloat16
    return jnp.float32


def _swish(x):
    # x * sigmoid(x).  sigmoid = 1 / (1 + exp(-x)); the divide is mapped to an
    # EUP approx reciprocal (pl.reciprocal wants f32); the final mul stays in
    # x's dtype so the bf16 path keeps bf16 vregs.
    s = pl.reciprocal(1.0 + jnp.exp(-x.astype(jnp.float32)), approx=True)
    return x * s.astype(x.dtype)


def diffusion_embedding_kernel(steps_ref, table_ref, w1_ref, b1_ref,
                               w2_ref, b2_ref, out_ref, *, act_dtype):
    # steps_ref: (bb, 1) f32 diffusion steps for this batch block.
    # table_ref: (2, input_dim) f32; row 0 = frequencies (duplicated halves),
    #            row 1 = phase (0 for the sin half, pi/2 for the cos half), so
    #            sin(t*w + phase) yields [sin(t*w), cos(t*w)] in one EUP pass.
    t = steps_ref[...]                                       # (bb, 1)
    arg = t * table_ref[0:1, :] + table_ref[1:2, :]          # (bb, input_dim)
    emb = jnp.sin(arg)

    # fc1 + swish: bf16 operands on the MXU, f32 accumulation.
    h1 = jnp.dot(emb.astype(w1_ref.dtype), w1_ref[...],
                 preferred_element_type=jnp.float32) + b1_ref[...]
    h1 = _swish(h1.astype(act_dtype))                        # bf16 on v6e/v7x, f32 on v5e

    # fc2 + swish.
    h2 = jnp.dot(h1.astype(w2_ref.dtype), w2_ref[...],
                 preferred_element_type=jnp.float32) + b2_ref[...]
    out_ref[...] = _swish(h2).astype(out_ref.dtype)


def diffusion_embedding(diffusion_steps, w1, b1, w2, b2, *, input_dim,
                        num_batch_blocks=None, max_block=2048,
                        weights_dtype=jnp.bfloat16, act_dtype=None,
                        out_dtype=jnp.float32, vmem_limit_bytes=None):
    """diffusion_steps: (B, 1).  w1: (input_dim, mid), b1: (1, mid),
    w2: (mid, out), b2: (1, out).  Returns (B, out) in out_dtype."""
    assert input_dim % 2 == 0, "input_dim must be even (sin/cos halves)"
    B = diffusion_steps.shape[0]
    mid_dim = w1.shape[1]
    out_dim = w2.shape[1]
    half = input_dim // 2

    if num_batch_blocks is None:
        num_batch_blocks = _default_num_batch_blocks()
    if act_dtype is None:
        act_dtype = _default_act_dtype()

    # --- hoisted sin-argument table: freq row + {0, pi/2} phase row ----------
    # DiffWave convention: w_j = exp(-j * ln(10000) / (half - 1)).  Diffusion
    # steps are O(1e3); at that magnitude sin(t*w + pi/2) == cos(t*w) to full
    # f32 accuracy.
    denom = max(half - 1, 1)  # guard input_dim == 2
    base = jnp.exp(-jnp.arange(half, dtype=jnp.float32) * (math.log(10000.0) / denom))
    freq = jnp.concatenate([base, base])
    phase = jnp.concatenate([jnp.zeros((half,), jnp.float32),
                             jnp.full((half,), 0.5 * math.pi, jnp.float32)])
    table = jnp.stack([freq, phase])                         # (2, input_dim)

    # bf16 weights: halve HBM->VMEM DMA, double MXU throughput; biases stay f32.
    w1c = w1.astype(weights_dtype)
    w2c = w2.astype(weights_dtype)
    b1c = b1.astype(jnp.float32)
    b2c = b2.astype(jnp.float32)
    steps = diffusion_steps.astype(jnp.float32)

    # --- batch tiling: few, large blocks; no padding and no post-slice -------
    bb = -(-B // num_batch_blocks)          # cdiv
    bb = min(bb, max_block)
    if bb < B:
        bb = _round_up(bb, 16)              # bf16 sublane packing; also % 8 == 0
    if bb >= B:
        bb = B                              # block == full batch: no divisibility constraint
    grid = (pl.cdiv(B, bb),)                # ragged last block is masked by Pallas

    # Advisory cost estimate: lets XLA schedule/overlap this tiny kernel.
    flops = 2 * B * (input_dim * mid_dim + mid_dim * out_dim)
    transcendentals = B * (input_dim + 2 * (mid_dim + out_dim))   # sin + exp + recip
    bytes_accessed = int(
        steps.size * 4 + table.size * 4
        + w1c.size * jnp.dtype(weights_dtype).itemsize + b1c.size * 4
        + w2c.size * jnp.dtype(weights_dtype).itemsize + b2c.size * 4
        + B * out_dim * jnp.dtype(out_dtype).itemsize)

    kernel = functools.partial(diffusion_embedding_kernel, act_dtype=act_dtype)

    # TODO(synk): single-buffer the constant-index inputs (W1/W2/table/biases)
    # via pipeline_mode=pl.Buffered(1) once confirmed supported on the target
    # JAX build; at the module-default dims the double-buffered constants fit
    # VMEM comfortably even under v7x's 32 MiB scoped default.
    return pl.pallas_call(
        kernel,
        out_shape=jax.ShapeDtypeStruct((B, out_dim), out_dtype),
        grid_spec=pl.GridSpec(
            grid=grid,
            in_specs=[
                pl.BlockSpec((bb, 1), lambda i: (i, 0)),               # steps (per block)
                pl.BlockSpec((2, input_dim), lambda i: (0, 0)),        # freq/phase table
                pl.BlockSpec((input_dim, mid_dim), lambda i: (0, 0)),  # W1 (VMEM-resident)
                pl.BlockSpec((1, mid_dim), lambda i: (0, 0)),          # b1
                pl.BlockSpec((mid_dim, out_dim), lambda i: (0, 0)),    # W2
                pl.BlockSpec((1, out_dim), lambda i: (0, 0)),          # b2
            ],
            out_specs=pl.BlockSpec((bb, out_dim), lambda i: (i, 0)),   # lane-dense out
        ),
        compiler_params=pltpu.CompilerParams(
            # Batch blocks are independent; on v7x this should shard the grid
            # across both TensorCores.  If a profile shows one TC idle, switch
            # to pltpu.CORE_PARALLEL / an explicit core_map.
            dimension_semantics=("parallel",),
            vmem_limit_bytes=vmem_limit_bytes),
        cost_estimate=pl.CostEstimate(flops=flops,
                                      transcendentals=transcendentals,
                                      bytes_accessed=bytes_accessed),
    )(steps, table, w1c, b1c, w2c, b2c)


def reference(diffusion_steps, w1, b1, w2, b2, input_dim):
    """Full-f32 reference matching the PyTorch module semantics."""
    half = input_dim // 2
    denom = max(half - 1, 1)
    freq = jnp.exp(-jnp.arange(half, dtype=jnp.float32) * (math.log(10000.0) / denom))
    arg = diffusion_steps.astype(jnp.float32) * freq[None, :]
    emb = jnp.concatenate([jnp.sin(arg), jnp.cos(arg)], axis=1)

    def swish(x):
        return x * jax.nn.sigmoid(x)

    h1 = swish(emb @ w1 + b1)
    return swish(h1 @ w2 + b2)


if __name__ == "__main__":
    # Module-default feature dims, small batch.
    B = 16
    input_dim = 128
    mid_dim = 512
    out_dim = 512

    key = jax.random.PRNGKey(0)
    k_steps, k_w1, k_b1, k_w2, k_b2 = jax.random.split(key, 5)

    # Diffusion step indices as (B, 1) float, like DiffWave.
    diffusion_steps = jax.random.randint(
        k_steps, (B, 1), 0, 200).astype(jnp.float32)

    # PyTorch-Linear-style init: U(-1/sqrt(fan_in), 1/sqrt(fan_in)); weights
    # stored pre-transposed as (in_features, out_features).
    lim1 = 1.0 / math.sqrt(input_dim)
    lim2 = 1.0 / math.sqrt(mid_dim)
    w1 = jax.random.uniform(k_w1, (input_dim, mid_dim), jnp.float32, -lim1, lim1)
    b1 = jax.random.uniform(k_b1, (1, mid_dim), jnp.float32, -lim1, lim1)
    w2 = jax.random.uniform(k_w2, (mid_dim, out_dim), jnp.float32, -lim2, lim2)
    b2 = jax.random.uniform(k_b2, (1, out_dim), jnp.float32, -lim2, lim2)

    out = diffusion_embedding(diffusion_steps, w1, b1, w2, b2, input_dim=input_dim)
    out = jax.block_until_ready(out)

    ref = reference(diffusion_steps, w1, b1, w2, b2, input_dim)
    assert out.shape == (B, out_dim)
    # bf16 matmul inputs + bf16 mid-activation + approx-reciprocal sigmoid ->
    # compare against the f32 reference with a bf16-level tolerance.
    assert jnp.allclose(out, ref, atol=3e-2, rtol=3e-2), "mismatch vs reference"

    print("KERNEL_OK")
</pallas_src>

<mosaic_0001>
module attributes {stable_mosaic.version = 11 : i64} {
  func.func @diffusion_embedding_kernel(%arg0: i32, %arg1: memref<16x1xf32, #tpu.memory_space<vmem>>, %arg2: memref<2x128xf32, #tpu.memory_space<vmem>>, %arg3: memref<128x512xbf16, #tpu.memory_space<vmem>>, %arg4: memref<1x512xf32, #tpu.memory_space<vmem>>, %arg5: memref<512x512xbf16, #tpu.memory_space<vmem>>, %arg6: memref<1x512xf32, #tpu.memory_space<vmem>>, %arg7: memref<16x512xf32, #tpu.memory_space<vmem>>) attributes {dimension_semantics = [#tpu.dimension_semantics<parallel>], iteration_bounds = array<i64: 1>, scalar_prefetch = 0 : i64, scratch_operands = 0 : i64, tpu.core_type = #tpu.core_type<tc>, window_params = [{transform_indices = @transform_0, window_bounds = array<i64: 16, 1>}, {pipeline_mode = #tpu.pipeline_mode<synchronous>, transform_indices = @transform_1, window_bounds = array<i64: 2, 128>}, {pipeline_mode = #tpu.pipeline_mode<synchronous>, transform_indices = @transform_2, window_bounds = array<i64: 128, 512>}, {pipeline_mode = #tpu.pipeline_mode<synchronous>, transform_indices = @transform_3, window_bounds = array<i64: 1, 512>}, {pipeline_mode = #tpu.pipeline_mode<synchronous>, transform_indices = @transform_4, window_bounds = array<i64: 512, 512>}, {pipeline_mode = #tpu.pipeline_mode<synchronous>, transform_indices = @transform_5, window_bounds = array<i64: 1, 512>}, {transform_indices = @transform_6, window_bounds = array<i64: 16, 512>}]} {
    %c0 = arith.constant 0 : index
    %c0_0 = arith.constant 0 : index
    %0 = vector.load %arg1[%c0, %c0_0] : memref<16x1xf32, #tpu.memory_space<vmem>>, vector<16x1xf32>
    %c0_1 = arith.constant 0 : index
    %c0_2 = arith.constant 0 : index
    %1 = vector.load %arg2[%c0_1, %c0_2] : memref<2x128xf32, #tpu.memory_space<vmem>>, vector<1x128xf32>
    %2 = vector.broadcast %0 : vector<16x1xf32> to vector<16x128xf32>
    %3 = vector.broadcast %1 : vector<1x128xf32> to vector<16x128xf32>
    %4 = arith.mulf %2, %3 : vector<16x128xf32>
    %c1 = arith.constant 1 : index
    %c0_3 = arith.constant 0 : index
    %5 = vector.load %arg2[%c1, %c0_3] : memref<2x128xf32, #tpu.memory_space<vmem>>, vector<1x128xf32>
    %6 = vector.broadcast %5 : vector<1x128xf32> to vector<16x128xf32>
    %7 = arith.addf %4, %6 : vector<16x128xf32>
    %8 = math.sin %7 : vector<16x128xf32>
    %9 = arith.truncf %8 : vector<16x128xf32> to vector<16x128xbf16>
    %c0_4 = arith.constant 0 : index
    %c0_5 = arith.constant 0 : index
    %10 = vector.load %arg3[%c0_4, %c0_5] : memref<128x512xbf16, #tpu.memory_space<vmem>>, vector<128x512xbf16>
    %cst = arith.constant dense<0.000000e+00> : vector<16x512xf32>
    %11 = tpu.matmul %9, %10, %cst {dimension_numbers = #tpu.dot_dimension_numbers<[1], [0], [0], [1], [0, 0, 1, 1], [], []>} : vector<16x128xbf16>, vector<128x512xbf16>, vector<16x512xf32> -> vector<16x512xf32>
    %c0_6 = arith.constant 0 : index
    %c0_7 = arith.constant 0 : index
    %12 = vector.load %arg4[%c0_6, %c0_7] : memref<1x512xf32, #tpu.memory_space<vmem>>, vector<1x512xf32>
    %13 = vector.broadcast %12 : vector<1x512xf32> to vector<16x512xf32>
    %14 = arith.addf %11, %13 : vector<16x512xf32>
    %cst_8 = arith.constant 0.000000e+00 : f32
    %15 = vector.broadcast %cst_8 : f32 to vector<16x512xf32>
    %16 = arith.subf %15, %14 : vector<16x512xf32>
    %17 = math.exp %16 : vector<16x512xf32>
    %cst_9 = arith.constant 1.000000e+00 : f32
    %18 = vector.broadcast %cst_9 : f32 to vector<16x512xf32>
    %19 = arith.addf %18, %17 : vector<16x512xf32>
    %20 = tpu.reciprocal %19 {approx = true} : vector<16x512xf32> -> vector<16x512xf32>
    %21 = arith.mulf %14, %20 : vector<16x512xf32>
    %22 = arith.truncf %21 : vector<16x512xf32> to vector<16x512xbf16>
    %c0_10 = arith.constant 0 : index
    %c0_11 = arith.constant 0 : index
    %23 = vector.load %arg5[%c0_10, %c0_11] : memref<512x512xbf16, #tpu.memory_space<vmem>>, vector<512x512xbf16>
    %cst_12 = arith.constant dense<0.000000e+00> : vector<16x512xf32>
    %24 = tpu.matmul %22, %23, %cst_12 {dimension_numbers = #tpu.dot_dimension_numbers<[1], [0], [0], [1], [0, 0, 1, 1], [], []>} : vector<16x512xbf16>, vector<512x512xbf16>, vector<16x512xf32> -> vector<16x512xf32>
    %c0_13 = arith.constant 0 : index
    %c0_14 = arith.constant 0 : index
    %25 = vector.load %arg6[%c0_13, %c0_14] : memref<1x512xf32, #tpu.memory_space<vmem>>, vector<1x512xf32>
    %26 = vector.broadcast %25 : vector<1x512xf32> to vector<16x512xf32>
    %27 = arith.addf %24, %26 : vector<16x512xf32>
    %cst_15 = arith.constant 0.000000e+00 : f32
    %28 = vector.broadcast %cst_15 : f32 to vector<16x512xf32>
    %29 = arith.subf %28, %27 : vector<16x512xf32>
    %30 = math.exp %29 : vector<16x512xf32>
    %cst_16 = arith.constant 1.000000e+00 : f32
    %31 = vector.broadcast %cst_16 : f32 to vector<16x512xf32>
    %32 = arith.addf %31, %30 : vector<16x512xf32>
    %33 = tpu.reciprocal %32 {approx = true} : vector<16x512xf32> -> vector<16x512xf32>
    %34 = arith.mulf %27, %33 : vector<16x512xf32>
    %c0_17 = arith.constant 0 : index
    %c0_18 = arith.constant 0 : index
    %35 = vector.load %arg7[%c0_17, %c0_18] : memref<16x512xf32, #tpu.memory_space<vmem>>, vector<16x512xf32>
    tpu.vector_store %arg7[%c0_17, %c0_18], %34 {strides = array<i32>} : memref<16x512xf32, #tpu.memory_space<vmem>>, vector<16x512xf32>,
    return
  }
  func.func @transform_0(%arg0: i32) -> (i32, i32) {
    %c0_i32 = arith.constant 0 : i32
    %c0_i32_0 = arith.constant 0 : i32
    return %arg0, %c0_i32 : i32, i32
  }
  func.func @transform_1(%arg0: i32) -> (i32, i32) {
    %c0_i32 = arith.constant 0 : i32
    %c0_i32_0 = arith.constant 0 : i32
    %c0_i32_1 = arith.constant 0 : i32
    return %c0_i32, %c0_i32_0 : i32, i32
  }
  func.func @transform_2(%arg0: i32) -> (i32, i32) {
    %c0_i32 = arith.constant 0 : i32
    %c0_i32_0 = arith.constant 0 : i32
    %c0_i32_1 = arith.constant 0 : i32
    return %c0_i32, %c0_i32_0 : i32, i32
  }
  func.func @transform_3(%arg0: i32) -> (i32, i32) {
    %c0_i32 = arith.constant 0 : i32
    %c0_i32_0 = arith.constant 0 : i32
    %c0_i32_1 = arith.constant 0 : i32
    return %c0_i32, %c0_i32_0 : i32, i32
  }
  func.func @transform_4(%arg0: i32) -> (i32, i32) {
    %c0_i32 = arith.constant 0 : i32
    %c0_i32_0 = arith.constant 0 : i32
    %c0_i32_1 = arith.constant 0 : i32
    return %c0_i32, %c0_i32_0 : i32, i32
  }
  func.func @transform_5(%arg0: i32) -> (i32, i32) {
    %c0_i32 = arith.constant 0 : i32
    %c0_i32_0 = arith.constant 0 : i32
    %c0_i32_1 = arith.constant 0 : i32
    return %c0_i32, %c0_i32_0 : i32, i32
  }
  func.func @transform_6(%arg0: i32) -> (i32, i32) {
    %c0_i32 = arith.constant 0 : i32
    %c0_i32_0 = arith.constant 0 : i32
    return %arg0, %c0_i32 : i32, i32
  }
}

</mosaic_0001>

<llo_original>
// kernel: tpu_custom_call.1
$region0: #{tpu_custom_call.1}
  #allocation0 [shape = 'u32[]', space=smem, size = 0x4, offset = 0x4, fixed_abs, tag = 'smem constant byte address 0x4 - core index']
  #allocation1 [shape = 'u32[144,128]{1,0:T(1,128)}', space=vmem, size = 0x12000, scoped, tag = 'internal scratch']
  %s0 = inlined_call_operand.vmem [shape: f32[16,1], index: 0, kind: input, shape index: {}]
  %s1 = inlined_call_operand.vmem [shape: f32[2,128], index: 1, kind: input, shape index: {}]
  %s2 = inlined_call_operand.hbm [shape: bf16[128,512], index: 2, kind: input, shape index: {}]
  %s3 = inlined_call_operand.vmem [shape: f32[1,512], index: 3, kind: input, shape index: {}]
  %s4 = inlined_call_operand.hbm [shape: bf16[512,512], index: 4, kind: input, shape index: {}]
  %s5 = inlined_call_operand.vmem [shape: f32[1,512], index: 5, kind: input, shape index: {}]
  %s6 = inlined_call_operand.hbm [shape: f32[16,512], index: 6, kind: output, shape index: {}]
  %s7 = sld [smem:[#allocation0]]
  $region42: #{tpu_custom_call.1} parent=0
    _
  %s9 = ssub.s32 1, %s7
  %s10 = scalar_select 0, %s9, %s7
  $region1: #{tpu_custom_call.1} parent=0
    #allocation2 [shape = 'u8[131072]{0}', space=vmem, size = 0x20000, scoped, tag = 'input window, operand 2, single buffered']
    #allocation3 [shape = 's32[1]{0}', space=sflag, size = 0x4, scoped, tag = 'scoped memory for tpu_custom_call.1']
    #allocation4 [shape = 's32[1]{0}', space=sflag, size = 0x4, scoped, tag = 'scoped memory for tpu_custom_call.1']
    #allocation5 [shape = 'u8[524288]{0}', space=vmem, size = 0x80000, scoped, tag = 'input window, operand 4, single buffered']
    #allocation6 [shape = 's32[1]{0}', space=sflag, size = 0x4, scoped, tag = 'scoped memory for tpu_custom_call.1']
    #allocation7 [shape = 'u8[32768]{0}', space=vmem, size = 0x8000, scoped, tag = 'output window, operand 0, single buffered']
    %11 = vsyncpa [#allocation3], 0
    %12 = vsyncpa [#allocation6], 0
    %13 = vsyncpa [#allocation4], 0
    // Predicated region
    $region2: #{tpu_custom_call.1} parent=1 // pred_check
      _
    $region3: #{tpu_custom_call.1} parent=1 // pred_check_branch
      %15 = sbr.rel (0) target = $region5
    $region4: #{tpu_custom_call.1} parent=1 // pred_region
      _
    $region5: #{tpu_custom_call.1} parent=1 // pred_fallthru
      _
    // Predicated region
    $region6: #{tpu_custom_call.1} parent=1 // pred_check
      _
    $region7: #{tpu_custom_call.1} parent=1 // pred_check_branch
      %17 = sbr.rel (0) target = $region9
    $region8: #{tpu_custom_call.1} parent=1 // pred_region
      _
    $region9: #{tpu_custom_call.1} parent=1 // pred_fallthru
      _
    // Predicated region
    $region10: #{tpu_custom_call.1} parent=1 // pred_check
      _
    $region11: #{tpu_custom_call.1} parent=1 // pred_check_branch
      %19 = sbr.rel (0) target = $region13
    $region12: #{tpu_custom_call.1} parent=1 // pred_region
      %s21 = ssub.s32 4096, 4096
      %22 = vsyncadd [#allocation3], %s21
      %s23 = sshll.u32 [#allocation2], 4
      %s24 = int_to_ptr.vmem [resolvable:$true] %s23
      %29 = dma.hbm_to_vmem [thread:$0]  %s2, 4096, %s24, [#allocation3], 256, 256, 16
    $region13: #{tpu_custom_call.1} parent=1 // pred_fallthru
      _
    // Predicated region
    $region14: #{tpu_custom_call.1} parent=1 // pred_check
      _
    $region15: #{tpu_custom_call.1} parent=1 // pred_check_branch
      %31 = sbr.rel (0) target = $region17
    $region16: #{tpu_custom_call.1} parent=1 // pred_region
      _
    $region17: #{tpu_custom_call.1} parent=1 // pred_fallthru
      _
    // Predicated region
    $region18: #{tpu_custom_call.1} parent=1 // pred_check
      _
    $region19: #{tpu_custom_call.1} parent=1 // pred_check_branch
      %33 = sbr.rel (0) target = $region21
    $region20: #{tpu_custom_call.1} parent=1 // pred_region
      %s35 = ssub.s32 16384, 16384
      %36 = vsyncadd [#allocation6], %s35
      %s37 = sshll.u32 [#allocation5], 4
      %s38 = int_to_ptr.vmem [resolvable:$true] %s37
      %43 = dma.hbm_to_vmem [thread:$0]  %s4, 16384, %s38, [#allocation6], 256, 256, 16
    $region21: #{tpu_custom_call.1} parent=1 // pred_fallthru
      _
    // Predicated region
    $region22: #{tpu_custom_call.1} parent=1 // pred_check
      _
    $region23: #{tpu_custom_call.1} parent=1 // pred_check_branch
      %45 = sbr.rel (0) target = $region25
    $region24: #{tpu_custom_call.1} parent=1 // pred_region
      _
    $region25: #{tpu_custom_call.1} parent=1 // pred_fallthru
      _
    // Predicated region
    $region26: #{tpu_custom_call.1} parent=1 // pred_check
      _
    $region27: #{tpu_custom_call.1} parent=1 // pred_check_branch
      %47 = sbr.rel (0) target = $region29
    $region28: #{tpu_custom_call.1} parent=1 // pred_region
      %48 = dma.done [#allocation3], 4096
    $region29: #{tpu_custom_call.1} parent=1 // pred_fallthru
      _
    // Predicated region
    $region30: #{tpu_custom_call.1} parent=1 // pred_check
      _
    $region31: #{tpu_custom_call.1} parent=1 // pred_check_branch
      %50 = sbr.rel (0) target = $region33
    $region32: #{tpu_custom_call.1} parent=1 // pred_region
      %51 = dma.done [#allocation6], 16384
    $region33: #{tpu_custom_call.1} parent=1 // pred_fallthru
      _
    %v53 = vld [vmem:[%s0] sm:$0xff]
    %v54 = vld [vmem:[%s0 + $0x8] sm:$0xff]
    %v55 = vld [vmem:[%s1] sm:$0x1]
    %57 = vset.pattern.permute.xlu0 0
    %58 = vperm.xlu0 %57, %v53
    %v59 = vpop.permute.xlu0 %58
    %62 = vset.pattern.permute.xlu0 0
    %63 = vperm.xlu0 %62, %v54
    %v64 = vpop.permute.xlu0 %63
    %v66 = vlaneseq
    %v67 = vshrl.u32 %v66, 7
    %v68 = vsub.s32 0, %v67
    %v69 = vrot.slane %v55, %v68
    %v70 = vmul.f32 %v59, %v69
    %v71 = vmul.f32 %v64, %v69
    %v72 = vld [vmem:[%s1 + $0x1] sm:$0x1]
    %v73 = vlaneseq
    %v74 = vshrl.u32 %v73, 7
    %v75 = vsub.s32 0, %v74
    %v76 = vrot.slane %v72, %v75
    %v77 = vadd.f32 %v70, %v76
    %v78 = vadd.f32 %v71, %v76
    %v79 = vand.u32 2147483647, %v77
    %vm80 = vcmp.le.f32.partialorder %v79, 0.7853982
    %vm81 = vcmp.lt.s32.totalorder %v77, 0
    %v82 = vand.u32 %v77, 2139095040
    %v83 = vshrl.u32 %v82, 23
    %v84 = vsub.s32 %v83, 127
    %v85 = vand.u32 2147483647, %v77
    %v86 = vand.u32 %v85, 8388607
    %v87 = vor.u32 %v86, 8388608
    %v88 = vsub.s32 0, %v87
    %v89 = vadd.s32 %v84, 1
    %vm90 = vcmp.gt.s32.totalorder %v89, 0
    %v91 = vsel %vm90, %v89, 0
    %v92 = vshrl.u32 %v91, 5
    %v93 = vand.u32 %v91, 31
    %v94 = vsub.s32 32, %v93
    %v95 = vshrl.u32 683565275, %v94
    %v96 = vshll.u32 683565275, %v93
    %v97 = vshrl.u32 2475754826, %v94
    %v98 = vor.u32 %v96, %v97
    %v99 = vshll.u32 2475754826, %v93
    %v100 = vshrl.u32 2131351028, %v94
    %v101 = vor.u32 %v99, %v100
    %v102 = vshll.u32 2131351028, %v93
    %v103 = vshrl.u32 2102212464, %v94
    %v104 = vor.u32 %v102, %v103
    %v105 = vshll.u32 2102212464, %v93
    %v106 = vshrl.u32 920167782, %v94
    %v107 = vor.u32 %v105, %v106
    %v108 = vshll.u32 920167782, %v93
    %v109 = vshrl.u32 1326507024, %v94
    %v110 = vor.u32 %v108, %v109
    %vm111 = vcmp.lt.s32.totalorder %v92, 1
    %vm112 = vcmp.lt.s32.totalorder %v92, 2
    %vm113 = vcmp.lt.s32.totalorder %v92, 3
    %vm114 = vcmp.lt.s32.totalorder %v92, 4
    %v115 = vsel %vm111, %v95, %v98
    %v116 = vsel %vm114, %v104, 2102212464
    %v117 = vsel %vm113, %v101, %v116
    %v118 = vsel %vm112, %v115, %v117
    %v119 = vsel %vm111, %v98, %v101
    %v120 = vsel %vm114, %v107, 920167782
    %v121 = vsel %vm113, %v104, %v120
    %v122 = vsel %vm112, %v119, %v121
    %v123 = vsel %vm111, %v101, %v104
    %v124 = vsel %vm114, %v110, 1326507024
    %v125 = vsel %vm113, %v107, %v124
    %v126 = vsel %vm112, %v123, %v125
    %v127 = vshll.u32 %v87, 8
    %v128 = vmul.u32.u64.compose %v127, %v126
    %v129 = vextract.low.u32 %v128
    %v130 = vextract.high.u32 %v128
    %v131 = vmul.u32.u64.compose %v127, %v122
    %v132 = vextract.low.u32 %v131
    %v133 = vextract.high.u32 %v131
    %v134 = vmul.u32 %v127, %v118
    %v135 = vadd.s32 %v130, %v132
    %vm136 = vc.u32 %v130, %v132
    %v137 = vadd.s32 %v133, 1
    %v138 = vsel %vm136, %v137, %v133
    %v139 = vadd.s32 %v134, %v138
    %v140 = vadd.s32 %v139, 536870912
    %v141 = vshrl.u32 %v140, 30
    %v142 = vshll.u32 %v141, 30
    %v143 = vsub.s32 %v139, %v142
    %vm144 = vcmp.lt.s32.totalorder %v143, 0
    %v145 = vsub.s32 0, %v143
    %v146 = vsel %vm144, %v145, %v143
    %v147 = vclz %v146
    %v148 = vsub.s32 %v147, 2
    %vm149 = vcmp.gt.s32.totalorder 0, %v148
    %v150 = vsel %vm149, 0, %v148
    %v151 = vsub.s32 32, %v150
    %v152 = vshll.u32 %v143, %v150
    %v153 = vshrl.u32 %v135, %v151
    %v154 = vor.u32 %v152, %v153
    %v155 = vsub.s32 4294967266, %v150
    %v156 = vadd.s32 %v155, 127
    %v157 = vshll.u32 %v156, 23
    %v158 = vor.u32 4788187, %v157
    %v159 = vand.u32 2147483647, %v158
    %v161 = vcvt.s32.f32 %v154
    %v162 = vmul.f32 %v161, %v159
    %v163 = vxor.u32 %v162, 2147483648
    %v164 = vsel %vm81, %v163, %v162
    %v165 = vsub.s32 4, %v141
    %v166 = vsel %vm81, %v165, %v141
    %v167 = vsel %vm80, %v77, %v164
    %v168 = vsel %vm80, 0, %v166
    %v169 = vcosq.f32.pop %v167
    %v170 = vsinq.f32.pop %v167
    %vm171 = vweird.f32 %v77
    %v172 = vadd.s32 %v168, 3
    %v173 = vand.u32 %v172, 3
    %vm174 = vcmp.lt.s32.totalorder %v173, 2
    %vm175 = vcmp.eq.s32.totalorder %v173, 0
    %v176 = vxor.u32 %v170, 2147483648
    %v177 = vsel %vm175, %v169, %v176
    %vm178 = vcmp.eq.s32.totalorder %v173, 2
    %v179 = vxor.u32 %v169, 2147483648
    %v180 = vsel %vm178, %v179, %v170
    %v181 = vsel %vm174, %v177, %v180
    %v182 = vsel %vm171, nan, %v181
    %v183 = vand.u32 2147483647, %v78
    %vm184 = vcmp.le.f32.partialorder %v183, 0.7853982
    %vm185 = vcmp.lt.s32.totalorder %v78, 0
    %v186 = vand.u32 %v78, 2139095040
    %v187 = vshrl.u32 %v186, 23
    %v188 = vsub.s32 %v187, 127
    %v189 = vand.u32 2147483647, %v78
    %v190 = vand.u32 %v189, 8388607
    %v191 = vor.u32 %v190, 8388608
    %v192 = vsub.s32 0, %v191
    %v193 = vadd.s32 %v188, 1
    %vm194 = vcmp.gt.s32.totalorder %v193, 0
    %v195 = vsel %vm194, %v193, 0
    %v196 = vshrl.u32 %v195, 5
    %v197 = vand.u32 %v195, 31
    %v198 = vsub.s32 32, %v197
    %v199 = vshrl.u32 683565275, %v198
    %v200 = vshll.u32 683565275, %v197
    %v201 = vshrl.u32 2475754826, %v198
    %v202 = vor.u32 %v200, %v201
    %v203 = vshll.u32 2475754826, %v197
    %v204 = vshrl.u32 2131351028, %v198
    %v205 = vor.u32 %v203, %v204
    %v206 = vshll.u32 2131351028, %v197
    %v207 = vshrl.u32 2102212464, %v198
    %v208 = vor.u32 %v206, %v207
    %v209 = vshll.u32 2102212464, %v197
    %v210 = vshrl.u32 920167782, %v198
    %v211 = vor.u32 %v209, %v210
    %v212 = vshll.u32 920167782, %v197
    %v213 = vshrl.u32 1326507024, %v198
    %v214 = vor.u32 %v212, %v213
    %vm215 = vcmp.lt.s32.totalorder %v196, 1
    %vm216 = vcmp.lt.s32.totalorder %v196, 2
    %vm217 = vcmp.lt.s32.totalorder %v196, 3
    %vm218 = vcmp.lt.s32.totalorder %v196, 4
    %v219 = vsel %vm215, %v199, %v202
    %v220 = vsel %vm218, %v208, 2102212464
    %v221 = vsel %vm217, %v205, %v220
    %v222 = vsel %vm216, %v219, %v221
    %v223 = vsel %vm215, %v202, %v205
    %v224 = vsel %vm218, %v211, 920167782
    %v225 = vsel %vm217, %v208, %v224
    %v226 = vsel %vm216, %v223, %v225
    %v227 = vsel %vm215, %v205, %v208
    %v228 = vsel %vm218, %v214, 1326507024
    %v229 = vsel %vm217, %v211, %v228
    %v230 = vsel %vm216, %v227, %v229
    %v231 = vshll.u32 %v191, 8
    %v232 = vmul.u32.u64.compose %v231, %v230
    %v233 = vextract.low.u32 %v232
    %v234 = vextract.high.u32 %v232
    %v235 = vmul.u32.u64.compose %v231, %v226
    %v236 = vextract.low.u32 %v235
    %v237 = vextract.high.u32 %v235
    %v238 = vmul.u32 %v231, %v222
    %v239 = vadd.s32 %v234, %v236
    %vm240 = vc.u32 %v234, %v236
    %v241 = vadd.s32 %v237, 1
    %v242 = vsel %vm240, %v241, %v237
    %v243 = vadd.s32 %v238, %v242
    %v244 = vadd.s32 %v243, 536870912
    %v245 = vshrl.u32 %v244, 30
    %v246 = vshll.u32 %v245, 30
    %v247 = vsub.s32 %v243, %v246
    %vm248 = vcmp.lt.s32.totalorder %v247, 0
    %v249 = vsub.s32 0, %v247
    %v250 = vsel %vm248, %v249, %v247
    %v251 = vclz %v250
    %v252 = vsub.s32 %v251, 2
    %vm253 = vcmp.gt.s32.totalorder 0, %v252
    %v254 = vsel %vm253, 0, %v252
    %v255 = vsub.s32 32, %v254
    %v256 = vshll.u32 %v247, %v254
    %v257 = vshrl.u32 %v239, %v255
    %v258 = vor.u32 %v256, %v257
    %v259 = vsub.s32 4294967266, %v254
    %v260 = vadd.s32 %v259, 127
    %v261 = vshll.u32 %v260, 23
    %v262 = vor.u32 4788187, %v261
    %v263 = vand.u32 2147483647, %v262
    %v265 = vcvt.s32.f32 %v258
    %v266 = vmul.f32 %v265, %v263
    %v267 = vxor.u32 %v266, 2147483648
    %v268 = vsel %vm185, %v267, %v266
    %v269 = vsub.s32 4, %v245
    %v270 = vsel %vm185, %v269, %v245
    %v271 = vsel %vm184, %v78, %v268
    %v272 = vsel %vm184, 0, %v270
    %v273 = vcosq.f32.pop %v271
    %v274 = vsinq.f32.pop %v271
    %vm275 = vweird.f32 %v78
    %v276 = vadd.s32 %v272, 3
    %v277 = vand.u32 %v276, 3
    %vm278 = vcmp.lt.s32.totalorder %v277, 2
    %vm279 = vcmp.eq.s32.totalorder %v277, 0
    %v280 = vxor.u32 %v274, 2147483648
    %v281 = vsel %vm279, %v273, %v280
    %vm282 = vcmp.eq.s32.totalorder %v277, 2
    %v283 = vxor.u32 %v273, 2147483648
    %v284 = vsel %vm282, %v283, %v274
    %v285 = vsel %vm278, %v281, %v284
    %v286 = vsel %vm275, nan, %v285
    %v287 = vpack.c.bf16 %v286, %v182
    %v288 = vld [vmem:[#allocation2] sm:$0xff]
    %v289 = vld [vmem:[#allocation2 + $0x8] sm:$0xff]
    %v290 = vld [vmem:[#allocation2 + $0x10] sm:$0xff]
    %v291 = vld [vmem:[#allocation2 + $0x18] sm:$0xff]
    %v292 = vld [vmem:[#allocation2 + $0x20] sm:$0xff]
    %v293 = vld [vmem:[#allocation2 + $0x28] sm:$0xff]
    %v294 = vld [vmem:[#allocation2 + $0x30] sm:$0xff]
    %v295 = vld [vmem:[#allocation2 + $0x38] sm:$0xff]
    %v296 = vld [vmem:[#allocation2 + $0x40] sm:$0xff]
    %v297 = vld [vmem:[#allocation2 + $0x48] sm:$0xff]
    %v298 = vld [vmem:[#allocation2 + $0x50] sm:$0xff]
    %v299 = vld [vmem:[#allocation2 + $0x58] sm:$0xff]
    %v300 = vld [vmem:[#allocation2 + $0x60] sm:$0xff]
    %v301 = vld [vmem:[#allocation2 + $0x68] sm:$0xff]
    %v302 = vld [vmem:[#allocation2 + $0x70] sm:$0xff]
    %v303 = vld [vmem:[#allocation2 + $0x78] sm:$0xff]
    %v304 = vld [vmem:[#allocation2 + $0x80] sm:$0xff]
    %v305 = vld [vmem:[#allocation2 + $0x88] sm:$0xff]
    %v306 = vld [vmem:[#allocation2 + $0x90] sm:$0xff]
    %v307 = vld [vmem:[#allocation2 + $0x98] sm:$0xff]
    %v308 = vld [vmem:[#allocation2 + $0xa0] sm:$0xff]
    %v309 = vld [vmem:[#allocation2 + $0xa8] sm:$0xff]
    %v310 = vld [vmem:[#allocation2 + $0xb0] sm:$0xff]
    %v311 = vld [vmem:[#allocation2 + $0xb8] sm:$0xff]
    %v312 = vld [vmem:[#allocation2 + $0xc0] sm:$0xff]
    %v313 = vld [vmem:[#allocation2 + $0xc8] sm:$0xff]
    %v314 = vld [vmem:[#allocation2 + $0xd0] sm:$0xff]
    %v315 = vld [vmem:[#allocation2 + $0xd8] sm:$0xff]
    %v316 = vld [vmem:[#allocation2 + $0xe0] sm:$0xff]
    %v317 = vld [vmem:[#allocation2 + $0xe8] sm:$0xff]
    %v318 = vld [vmem:[#allocation2 + $0xf0] sm:$0xff]
    %v319 = vld [vmem:[#allocation2 + $0xf8] sm:$0xff]
    %v320 = vld [vmem:[%s3] sm:$0xf]
    %v322 = vlaneseq
    %v323 = vshrl.u32 %v322, 7
    %v324 = vsub.s32 0, %v323
    %v325 = vrot.slane %v320, %v324
    %v326 = vlaneseq
    %v327 = vshrl.u32 %v326, 7
    %v328 = vsub.s32 1, %v327
    %v329 = vrot.slane %v320, %v328
    %v330 = vlaneseq
    %v331 = vshrl.u32 %v330, 7
    %v332 = vsub.s32 2, %v331
    %v333 = vrot.slane %v320, %v332
    %v334 = vlaneseq
    %v335 = vshrl.u32 %v334, 7
    %v336 = vsub.s32 3, %v335
    %v337 = vrot.slane %v320, %v336
    %v374 = vunpack.c.l.b16 %v288
    %v375 = vunpack.c.h.b16 %v288
    %v376 = vunpack.c.l.b16 %v289
    %v377 = vunpack.c.h.b16 %v289
    %v378 = vunpack.c.l.b16 %v290
    %v379 = vunpack.c.h.b16 %v290
    %v380 = vunpack.c.l.b16 %v291
    %v381 = vunpack.c.h.b16 %v291
    %v382 = vunpack.c.l.b16 %v292
    %v383 = vunpack.c.h.b16 %v292
    %v384 = vunpack.c.l.b16 %v293
    %v385 = vunpack.c.h.b16 %v293
    %v386 = vunpack.c.l.b16 %v294
    %v387 = vunpack.c.h.b16 %v294
    %v388 = vunpack.c.l.b16 %v295
    %v389 = vunpack.c.h.b16 %v295
    %v390 = vunpack.c.l.b16 %v296
    %v391 = vunpack.c.h.b16 %v296
    %v392 = vunpack.c.l.b16 %v297
    %v393 = vunpack.c.h.b16 %v297
    %v394 = vunpack.c.l.b16 %v298
    %v395 = vunpack.c.h.b16 %v298
    %v396 = vunpack.c.l.b16 %v299
    %v397 = vunpack.c.h.b16 %v299
    %v398 = vunpack.c.l.b16 %v300
    %v399 = vunpack.c.h.b16 %v300
    %v400 = vunpack.c.l.b16 %v301
    %v401 = vunpack.c.h.b16 %v301
    %v402 = vunpack.c.l.b16 %v302
    %v403 = vunpack.c.h.b16 %v302
    %v404 = vunpack.c.l.b16 %v303
    %v405 = vunpack.c.h.b16 %v303
    %v406 = vunpack.c.l.b16 %v304
    %v407 = vunpack.c.h.b16 %v304
    %v408 = vunpack.c.l.b16 %v305
    %v409 = vunpack.c.h.b16 %v305
    %v410 = vunpack.c.l.b16 %v306
    %v411 = vunpack.c.h.b16 %v306
    %v412 = vunpack.c.l.b16 %v307
    %v413 = vunpack.c.h.b16 %v307
    %v414 = vunpack.c.l.b16 %v308
    %v415 = vunpack.c.h.b16 %v308
    %v416 = vunpack.c.l.b16 %v309
    %v417 = vunpack.c.h.b16 %v309
    %v418 = vunpack.c.l.b16 %v310
    %v419 = vunpack.c.h.b16 %v310
    %v420 = vunpack.c.l.b16 %v311
    %v421 = vunpack.c.h.b16 %v311
    %v422 = vunpack.c.l.b16 %v312
    %v423 = vunpack.c.h.b16 %v312
    %v424 = vunpack.c.l.b16 %v313
    %v425 = vunpack.c.h.b16 %v313
    %v426 = vunpack.c.l.b16 %v314
    %v427 = vunpack.c.h.b16 %v314
    %v428 = vunpack.c.l.b16 %v315
    %v429 = vunpack.c.h.b16 %v315
    %v430 = vunpack.c.l.b16 %v316
    %v431 = vunpack.c.h.b16 %v316
    %v432 = vunpack.c.l.b16 %v317
    %v433 = vunpack.c.h.b16 %v317
    %v434 = vunpack.c.l.b16 %v318
    %v435 = vunpack.c.h.b16 %v318
    %v436 = vunpack.c.l.b16 %v319
    %v437 = vunpack.c.h.b16 %v319
    %v438 = vpack.c.b16 %v378, %v374
    %v439 = vpack.c.b16 %v379, %v375
    %v440 = vpack.c.b16 %v380, %v376
    %v441 = vpack.c.b16 %v381, %v377
    %v442 = vpack.c.b16 %v386, %v382
    %v443 = vpack.c.b16 %v387, %v383
    %v444 = vpack.c.b16 %v388, %v384
    %v445 = vpack.c.b16 %v389, %v385
    %v446 = vpack.c.b16 %v394, %v390
    %v447 = vpack.c.b16 %v395, %v391
    %v448 = vpack.c.b16 %v396, %v392
    %v449 = vpack.c.b16 %v397, %v393
    %v450 = vpack.c.b16 %v402, %v398
    %v451 = vpack.c.b16 %v403, %v399
    %v452 = vpack.c.b16 %v404, %v400
    %v453 = vpack.c.b16 %v405, %v401
    %v454 = vpack.c.b16 %v410, %v406
    %v455 = vpack.c.b16 %v411, %v407
    %v456 = vpack.c.b16 %v412, %v408
    %v457 = vpack.c.b16 %v413, %v409
    %v458 = vpack.c.b16 %v418, %v414
    %v459 = vpack.c.b16 %v419, %v415
    %v460 = vpack.c.b16 %v420, %v416
    %v461 = vpack.c.b16 %v421, %v417
    %v462 = vpack.c.b16 %v426, %v422
    %v463 = vpack.c.b16 %v427, %v423
    %v464 = vpack.c.b16 %v428, %v424
    %v465 = vpack.c.b16 %v429, %v425
    %v466 = vpack.c.b16 %v434, %v430
    %v467 = vpack.c.b16 %v435, %v431
    %v468 = vpack.c.b16 %v436, %v432
    %v469 = vpack.c.b16 %v437, %v433
    %502 = vmatprep.subr.bf16.mxu0 %v467
    %503 = vmatpush1.bf16.msra.mxu0 %v466
    %504 = vmatprep.subr.bf16.mxu0 %v463
    %505 = vmatpush1.bf16.msra.mxu0 %v462
    %506 = vmatprep.subr.bf16.mxu0 %v459
    %507 = vmatpush1.bf16.msra.mxu0 %v458
    %508 = vmatprep.subr.bf16.mxu0 %v455
    %509 = vmatpush1.bf16.msra.mxu0 %v454
    %510 = vmatprep.subr.bf16.mxu0 %v451
    %511 = vmatpush1.bf16.msra.mxu0 %v450
    %512 = vmatprep.subr.bf16.mxu0 %v447
    %513 = vmatpush1.bf16.msra.mxu0 %v446
    %514 = vmatprep.subr.bf16.mxu0 %v443
    %515 = vmatpush1.bf16.msra.mxu0 %v442
    %516 = vmatprep.subr.bf16.mxu0 %v439
    %517 = vmatpush1.bf16.msra.mxu0 %v438
    %518 = vmatprep.subr.bf16.mxu0 0
    %519 = vmatpush2.bf16.msra.mxu0 0
    %520 = vmatprep.subr.bf16.mxu0 0
    %521 = vmatpush2.bf16.msra.mxu0 0
    %522 = vmatprep.subr.bf16.mxu0 0
    %523 = vmatpush2.bf16.msra.mxu0 0
    %524 = vmatprep.subr.bf16.mxu0 0
    %525 = vmatpush2.bf16.msra.mxu0 0
    %526 = vmatprep.subr.bf16.mxu0 0
    %527 = vmatpush2.bf16.msra.mxu0 0
    %528 = vmatprep.subr.bf16.mxu0 0
    %529 = vmatpush2.bf16.msra.mxu0 0
    %530 = vmatprep.subr.bf16.mxu0 0
    %531 = vmatpush2.bf16.msra.mxu0 0
    %532 = vmatprep.subr.bf16.mxu0 0
    %533 = vmatpush2.bf16.msra.mxu0 0
    %534 = vmatprep.mubr.bf16.mxu0 0
    %535 = vmatmul.mubr.bf16.gmra.mxu0 %v287
    %v536 = vpop.f32.mrf.mxu0
    %v537 = vadd.f32 %v325, %v536
    %v538 = vpop.f32.mrf.mxu0
    %v539 = vadd.f32 %v329, %v538
    %v540 = vpop.f32.mrf.mxu0
    %v541 = vadd.f32 %v325, %v540
    %v542 = vpop.f32.mrf.mxu0
    %v543 = vadd.f32 %v329, %v542
    %544 = vdwg.mxu0
    %545 = vmatprep.subr.bf16.mxu0 %v469
    %546 = vmatpush1.bf16.msra.mxu0 %v468
    %547 = vmatprep.subr.bf16.mxu0 %v465
    %548 = vmatpush1.bf16.msra.mxu0 %v464
    %549 = vmatprep.subr.bf16.mxu0 %v461
    %550 = vmatpush1.bf16.msra.mxu0 %v460
    %551 = vmatprep.subr.bf16.mxu0 %v457
    %552 = vmatpush1.bf16.msra.mxu0 %v456
    %553 = vmatprep.subr.bf16.mxu0 %v453
    %554 = vmatpush1.bf16.msra.mxu0 %v452
    %555 = vmatprep.subr.bf16.mxu0 %v449
    %556 = vmatpush1.bf16.msra.mxu0 %v448
    %557 = vmatprep.subr.bf16.mxu0 %v445
    %558 = vmatpush1.bf16.msra.mxu0 %v444
    %559 = vmatprep.subr.bf16.mxu0 %v441
    %560 = vmatpush1.bf16.msra.mxu0 %v440
    %561 = vmatprep.subr.bf16.mxu0 0
    %562 = vmatpush2.bf16.msra.mxu0 0
    %563 = vmatprep.subr.bf16.mxu0 0
    %564 = vmatpush2.bf16.msra.mxu0 0
    %565 = vmatprep.subr.bf16.mxu0 0
    %566 = vmatpush2.bf16.msra.mxu0 0
    %567 = vmatprep.subr.bf16.mxu0 0
    %568 = vmatpush2.bf16.msra.mxu0 0
    %569 = vmatprep.subr.bf16.mxu0 0
    %570 = vmatpush2.bf16.msra.mxu0 0
    %571 = vmatprep.subr.bf16.mxu0 0
    %572 = vmatpush2.bf16.msra.mxu0 0
    %573 = vmatprep.subr.bf16.mxu0 0
    %574 = vmatpush2.bf16.msra.mxu0 0
    %575 = vmatprep.subr.bf16.mxu0 0
    %576 = vmatpush2.bf16.msra.mxu0 0
    %577 = vmatprep.mubr.bf16.mxu0 0
    %578 = vmatmul.mubr.bf16.gmra.mxu0 %v287
    %v579 = vpop.f32.mrf.mxu0
    %v580 = vadd.f32 %v333, %v579
    %v581 = vpop.f32.mrf.mxu0
    %v582 = vadd.f32 %v337, %v581
    %v583 = vpop.f32.mrf.mxu0
    %v584 = vadd.f32 %v333, %v583
    %v585 = vpop.f32.mrf.mxu0
    %v586 = vadd.f32 %v337, %v585
    %587 = vdwg.mxu0
    %v588 = vsub.f32 0.0, %v537
    %v589 = vsub.f32 0.0, %v539
    %v590 = vsub.f32 0.0, %v580
    %v591 = vsub.f32 0.0, %v582
    %v592 = vsub.f32 0.0, %v541
    %v593 = vsub.f32 0.0, %v543
    %v594 = vsub.f32 0.0, %v584
    %v595 = vsub.f32 0.0, %v586
    %v596 = vmul.f32 %v588, 1.442695
    %v597 = vpow.pop %v596
    %v598 = vmul.f32 %v589, 1.442695
    %v599 = vpow.pop %v598
    %v600 = vmul.f32 %v590, 1.442695
    %v601 = vpow.pop %v600
    %v602 = vmul.f32 %v591, 1.442695
    %v603 = vpow.pop %v602
    %v604 = vmul.f32 %v592, 1.442695
    %v605 = vpow.pop %v604
    %v606 = vmul.f32 %v593, 1.442695
    %v607 = vpow.pop %v606
    %v608 = vmul.f32 %v594, 1.442695
    %v609 = vpow.pop %v608
    %v610 = vmul.f32 %v595, 1.442695
    %v611 = vpow.pop %v610
    %v612 = vadd.f32 %v597, 1.0
    %v613 = vadd.f32 %v599, 1.0
    %v614 = vadd.f32 %v601, 1.0
    %v615 = vadd.f32 %v603, 1.0
    %v616 = vadd.f32 %v605, 1.0
    %v617 = vadd.f32 %v607, 1.0
    %v618 = vadd.f32 %v609, 1.0
    %v619 = vadd.f32 %v611, 1.0
    %v620 = vrcp.pop %v612
    %v621 = vrcp.pop %v613
    %v622 = vrcp.pop %v614
    %v623 = vrcp.pop %v615
    %v624 = vrcp.pop %v616
    %v625 = vrcp.pop %v617
    %v626 = vrcp.pop %v618
    %v627 = vrcp.pop %v619
    %v628 = vmul.f32 %v537, %v620
    %v629 = vmul.f32 %v539, %v621
    %v630 = vmul.f32 %v580, %v622
    %v631 = vmul.f32 %v582, %v623
    %v632 = vmul.f32 %v541, %v624
    %v633 = vmul.f32 %v543, %v625
    %v634 = vmul.f32 %v584, %v626
    %v635 = vmul.f32 %v586, %v627
    %v636 = vpack.c.bf16 %v632, %v628
    %v637 = vpack.c.bf16 %v633, %v629
    %v638 = vpack.c.bf16 %v634, %v630
    %v639 = vpack.c.bf16 %v635, %v631
    %v640 = vld [vmem:[#allocation5] sm:$0xff]
    %v641 = vld [vmem:[#allocation5 + $0x8] sm:$0xff]
    %v642 = vld [vmem:[#allocation5 + $0x10] sm:$0xff]
    %v643 = vld [vmem:[#allocation5 + $0x18] sm:$0xff]
    %v644 = vld [vmem:[#allocation5 + $0x20] sm:$0xff]
    %v645 = vld [vmem:[#allocation5 + $0x28] sm:$0xff]
    %v646 = vld [vmem:[#allocation5 + $0x30] sm:$0xff]
    %v647 = vld [vmem:[#allocation5 + $0x38] sm:$0xff]
    %v648 = vld [vmem:[#allocation5 + $0x40] sm:$0xff]
    %v649 = vld [vmem:[#allocation5 + $0x48] sm:$0xff]
    %v650 = vld [vmem:[#allocation5 + $0x50] sm:$0xff]
    %v651 = vld [vmem:[#allocation5 + $0x58] sm:$0xff]
    %v652 = vld [vmem:[#allocation5 + $0x60] sm:$0xff]
    %v653 = vld [vmem:[#allocation5 + $0x68] sm:$0xff]
    %v654 = vld [vmem:[#allocation5 + $0x70] sm:$0xff]
    %v655 = vld [vmem:[#allocation5 + $0x78] sm:$0xff]
    %v656 = vld [vmem:[#allocation5 + $0x80] sm:$0xff]
    %v657 = vld [vmem:[#allocation5 + $0x88] sm:$0xff]
    %v658 = vld [vmem:[#allocation5 + $0x90] sm:$0xff]
    %v659 = vld [vmem:[#allocation5 + $0x98] sm:$0xff]
    %v660 = vld [vmem:[#allocation5 + $0xa0] sm:$0xff]
    %v661 = vld [vmem:[#allocation5 + $0xa8] sm:$0xff]
    %v662 = vld [vmem:[#allocation5 + $0xb0] sm:$0xff]
    %v663 = vld [vmem:[#allocation5 + $0xb8] sm:$0xff]
    %v664 = vld [vmem:[#allocation5 + $0xc0] sm:$0xff]
    %v665 = vld [vmem:[#allocation5 + $0xc8] sm:$0xff]
    %v666 = vld [vmem:[#allocation5 + $0xd0] sm:$0xff]
    %v667 = vld [vmem:[#allocation5 + $0xd8] sm:$0xff]
    %v668 = vld [vmem:[#allocation5 + $0xe0] sm:$0xff]
    %v669 = vld [vmem:[#allocation5 + $0xe8] sm:$0xff]
    %v670 = vld [vmem:[#allocation5 + $0xf0] sm:$0xff]
    %v671 = vld [vmem:[#allocation5 + $0xf8] sm:$0xff]
    %v672 = vld [vmem:[#allocation5 + $0x100] sm:$0xff]
    %v673 = vld [vmem:[#allocation5 + $0x108] sm:$0xff]
    %v674 = vld [vmem:[#allocation5 + $0x110] sm:$0xff]
    %v675 = vld [vmem:[#allocation5 + $0x118] sm:$0xff]
    %v676 = vld [vmem:[#allocation5 + $0x120] sm:$0xff]
    %v677 = vld [vmem:[#allocation5 + $0x128] sm:$0xff]
    %v678 = vld [vmem:[#allocation5 + $0x130] sm:$0xff]
    %v679 = vld [vmem:[#allocation5 + $0x138] sm:$0xff]
    %v680 = vld [vmem:[#allocation5 + $0x140] sm:$0xff]
    %v681 = vld [vmem:[#allocation5 + $0x148] sm:$0xff]
    %v682 = vld [vmem:[#allocation5 + $0x150] sm:$0xff]
    %v683 = vld [vmem:[#allocation5 + $0x158] sm:$0xff]
    %v684 = vld [vmem:[#allocation5 + $0x160] sm:$0xff]
    %v685 = vld [vmem:[#allocation5 + $0x168] sm:$0xff]
    %v686 = vld [vmem:[#allocation5 + $0x170] sm:$0xff]
    %v687 = vld [vmem:[#allocation5 + $0x178] sm:$0xff]
    %v688 = vld [vmem:[#allocation5 + $0x180] sm:$0xff]
    %v689 = vld [vmem:[#allocation5 + $0x188] sm:$0xff]
    %v690 = vld [vmem:[#allocation5 + $0x190] sm:$0xff]
    %v691 = vld [vmem:[#allocation5 + $0x198] sm:$0xff]
    %v692 = vld [vmem:[#allocation5 + $0x1a0] sm:$0xff]
    %v693 = vld [vmem:[#allocation5 + $0x1a8] sm:$0xff]
    %v694 = vld [vmem:[#allocation5 + $0x1b0] sm:$0xff]
    %v695 = vld [vmem:[#allocation5 + $0x1b8] sm:$0xff]
    %v696 = vld [vmem:[#allocation5 + $0x1c0] sm:$0xff]
    %v697 = vld [vmem:[#allocation5 + $0x1c8] sm:$0xff]
    %v698 = vld [vmem:[#allocation5 + $0x1d0] sm:$0xff]
    %v699 = vld [vmem:[#allocation5 + $0x1d8] sm:$0xff]
    %v700 = vld [vmem:[#allocation5 + $0x1e0] sm:$0xff]
    %v701 = vld [vmem:[#allocation5 + $0x1e8] sm:$0xff]
    %v702 = vld [vmem:[#allocation5 + $0x1f0] sm:$0xff]
    %v703 = vld [vmem:[#allocation5 + $0x1f8] sm:$0xff]
    %v704 = vld [vmem:[#allocation5 + $0x200] sm:$0xff]
    %v705 = vld [vmem:[#allocation5 + $0x208] sm:$0xff]
    %v706 = vld [vmem:[#allocation5 + $0x210] sm:$0xff]
    %v707 = vld [vmem:[#allocation5 + $0x218] sm:$0xff]
    %v708 = vld [vmem:[#allocation5 + $0x220] sm:$0xff]
    %v709 = vld [vmem:[#allocation5 + $0x228] sm:$0xff]
    %v710 = vld [vmem:[#allocation5 + $0x230] sm:$0xff]
    %v711 = vld [vmem:[#allocation5 + $0x238] sm:$0xff]
    %v712 = vld [vmem:[#allocation5 + $0x240] sm:$0xff]
    %v713 = vld [vmem:[#allocation5 + $0x248] sm:$0xff]
    %v714 = vld [vmem:[#allocation5 + $0x250] sm:$0xff]
    %v715 = vld [vmem:[#allocation5 + $0x258] sm:$0xff]
    %v716 = vld [vmem:[#allocation5 + $0x260] sm:$0xff]
    %v717 = vld [vmem:[#allocation5 + $0x268] sm:$0xff]
    %v718 = vld [vmem:[#allocation5 + $0x270] sm:$0xff]
    %v719 = vld [vmem:[#allocation5 + $0x278] sm:$0xff]
    %v720 = vld [vmem:[#allocation5 + $0x280] sm:$0xff]
    %v721 = vld [vmem:[#allocation5 + $0x288] sm:$0xff]
    %v722 = vld [vmem:[#allocation5 + $0x290] sm:$0xff]
    %v723 = vld [vmem:[#allocation5 + $0x298] sm:$0xff]
    %v724 = vld [vmem:[#allocation5 + $0x2a0] sm:$0xff]
    %v725 = vld [vmem:[#allocation5 + $0x2a8] sm:$0xff]
    %v726 = vld [vmem:[#allocation5 + $0x2b0] sm:$0xff]
    %v727 = vld [vmem:[#allocation5 + $0x2b8] sm:$0xff]
    %v728 = vld [vmem:[#allocation5 + $0x2c0] sm:$0xff]
    %v729 = vld [vmem:[#allocation5 + $0x2c8] sm:$0xff]
    %v730 = vld [vmem:[#allocation5 + $0x2d0] sm:$0xff]
    %v731 = vld [vmem:[#allocation5 + $0x2d8] sm:$0xff]
    %v732 = vld [vmem:[#allocation5 + $0x2e0] sm:$0xff]
    %v733 = vld [vmem:[#allocation5 + $0x2e8] sm:$0xff]
    %v734 = vld [vmem:[#allocation5 + $0x2f0] sm:$0xff]
    %v735 = vld [vmem:[#allocation5 + $0x2f8] sm:$0xff]
    %v736 = vld [vmem:[#allocation5 + $0x300] sm:$0xff]
    %v737 = vld [vmem:[#allocation5 + $0x308] sm:$0xff]
    %v738 = vld [vmem:[#allocation5 + $0x310] sm:$0xff]
    %v739 = vld [vmem:[#allocation5 + $0x318] sm:$0xff]
    %v740 = vld [vmem:[#allocation5 + $0x320] sm:$0xff]
    %v741 = vld [vmem:[#allocation5 + $0x328] sm:$0xff]
    %v742 = vld [vmem:[#allocation5 + $0x330] sm:$0xff]
    %v743 = vld [vmem:[#allocation5 + $0x338] sm:$0xff]
    %v744 = vld [vmem:[#allocation5 + $0x340] sm:$0xff]
    %v745 = vld [vmem:[#allocation5 + $0x348] sm:$0xff]
    %v746 = vld [vmem:[#allocation5 + $0x350] sm:$0xff]
    %v747 = vld [vmem:[#allocation5 + $0x358] sm:$0xff]
    %v748 = vld [vmem:[#allocation5 + $0x360] sm:$0xff]
    %v749 = vld [vmem:[#allocation5 + $0x368] sm:$0xff]
    %v750 = vld [vmem:[#allocation5 + $0x370] sm:$0xff]
    %v751 = vld [vmem:[#allocation5 + $0x378] sm:$0xff]
    %v752 = vld [vmem:[#allocation5 + $0x380] sm:$0xff]
    %v753 = vld [vmem:[#allocation5 + $0x388] sm:$0xff]
    %v754 = vld [vmem:[#allocation5 + $0x390] sm:$0xff]
    %v755 = vld [vmem:[#allocation5 + $0x398] sm:$0xff]
    %v756 = vld [vmem:[#allocation5 + $0x3a0] sm:$0xff]
    %v757 = vld [vmem:[#allocation5 + $0x3a8] sm:$0xff]
    %v758 = vld [vmem:[#allocation5 + $0x3b0] sm:$0xff]
    %v759 = vld [vmem:[#allocation5 + $0x3b8] sm:$0xff]
    %v760 = vld [vmem:[#allocation5 + $0x3c0] sm:$0xff]
    %v761 = vld [vmem:[#allocation5 + $0x3c8] sm:$0xff]
    %v762 = vld [vmem:[#allocation5 + $0x3d0] sm:$0xff]
    %v763 = vld [vmem:[#allocation5 + $0x3d8] sm:$0xff]
    %v764 = vld [vmem:[#allocation5 + $0x3e0] sm:$0xff]
    %v765 = vld [vmem:[#allocation5 + $0x3e8] sm:$0xff]
    %v766 = vld [vmem:[#allocation5 + $0x3f0] sm:$0xff]
    %v767 = vld [vmem:[#allocation5 + $0x3f8] sm:$0xff]
    %v768 = vld [vmem:[%s5] sm:$0xf]
    %v770 = vlaneseq
    %v771 = vshrl.u32 %v770, 7
    %v772 = vsub.s32 0, %v771
    %v773 = vrot.slane %v768, %v772
    %v774 = vlaneseq
    %v775 = vshrl.u32 %v774, 7
    %v776 = vsub.s32 1, %v775
    %v777 = vrot.slane %v768, %v776
    %v778 = vlaneseq
    %v779 = vshrl.u32 %v778, 7
    %v780 = vsub.s32 2, %v779
    %v781 = vrot.slane %v768, %v780
    %v782 = vlaneseq
    %v783 = vshrl.u32 %v782, 7
    %v784 = vsub.s32 3, %v783
    %v785 = vrot.slane %v768, %v784
    %v918 = vunpack.c.l.b16 %v640
    %v919 = vunpack.c.h.b16 %v640
    %v920 = vunpack.c.l.b16 %v641
    %v921 = vunpack.c.h.b16 %v641
    %v922 = vunpack.c.l.b16 %v642
    %v923 = vunpack.c.h.b16 %v642
    %v924 = vunpack.c.l.b16 %v643
    %v925 = vunpack.c.h.b16 %v643
    %v926 = vunpack.c.l.b16 %v644
    %v927 = vunpack.c.h.b16 %v644
    %v928 = vunpack.c.l.b16 %v645
    %v929 = vunpack.c.h.b16 %v645
    %v930 = vunpack.c.l.b16 %v646
    %v931 = vunpack.c.h.b16 %v646
    %v932 = vunpack.c.l.b16 %v647
    %v933 = vunpack.c.h.b16 %v647
    %v934 = vunpack.c.l.b16 %v648
    %v935 = vunpack.c.h.b16 %v648
    %v936 = vunpack.c.l.b16 %v649
    %v937 = vunpack.c.h.b16 %v649
    %v938 = vunpack.c.l.b16 %v650
    %v939 = vunpack.c.h.b16 %v650
    %v940 = vunpack.c.l.b16 %v651
    %v941 = vunpack.c.h.b16 %v651
    %v942 = vunpack.c.l.b16 %v652
    %v943 = vunpack.c.h.b16 %v652
    %v944 = vunpack.c.l.b16 %v653
    %v945 = vunpack.c.h.b16 %v653
    %v946 = vunpack.c.l.b16 %v654
    %v947 = vunpack.c.h.b16 %v654
    %v948 = vunpack.c.l.b16 %v655
    %v949 = vunpack.c.h.b16 %v655
    %v950 = vunpack.c.l.b16 %v656
    %v951 = vunpack.c.h.b16 %v656
    %v952 = vunpack.c.l.b16 %v657
    %v953 = vunpack.c.h.b16 %v657
    %v954 = vunpack.c.l.b16 %v658
    %v955 = vunpack.c.h.b16 %v658
    %v956 = vunpack.c.l.b16 %v659
    %v957 = vunpack.c.h.b16 %v659
    %v958 = vunpack.c.l.b16 %v660
    %v959 = vunpack.c.h.b16 %v660
    %v960 = vunpack.c.l.b16 %v661
    %v961 = vunpack.c.h.b16 %v661
    %v962 = vunpack.c.l.b16 %v662
    %v963 = vunpack.c.h.b16 %v662
    %v964 = vunpack.c.l.b16 %v663
    %v965 = vunpack.c.h.b16 %v663
    %v966 = vunpack.c.l.b16 %v664
    %v967 = vunpack.c.h.b16 %v664
    %v968 = vunpack.c.l.b16 %v665
    %v969 = vunpack.c.h.b16 %v665
    %v970 = vunpack.c.l.b16 %v666
    %v971 = vunpack.c.h.b16 %v666
    %v972 = vunpack.c.l.b16 %v667
    %v973 = vunpack.c.h.b16 %v667
    %v974 = vunpack.c.l.b16 %v668
    %v975 = vunpack.c.h.b16 %v668
    %v976 = vunpack.c.l.b16 %v669
    %v977 = vunpack.c.h.b16 %v669
    %v978 = vunpack.c.l.b16 %v670
    %v979 = vunpack.c.h.b16 %v670
    %v980 = vunpack.c.l.b16 %v671
    %v981 = vunpack.c.h.b16 %v671
    %v982 = vunpack.c.l.b16 %v672
    %v983 = vunpack.c.h.b16 %v672
    %v984 = vunpack.c.l.b16 %v673
    %v985 = vunpack.c.h.b16 %v673
    %v986 = vunpack.c.l.b16 %v674
    %v987 = vunpack.c.h.b16 %v674
    %v988 = vunpack.c.l.b16 %v675
    %v989 = vunpack.c.h.b16 %v675
    %v990 = vunpack.c.l.b16 %v676
    %v991 = vunpack.c.h.b16 %v676
    %v992 = vunpack.c.l.b16 %v677
    %v993 = vunpack.c.h.b16 %v677
    %v994 = vunpack.c.l.b16 %v678
    %v995 = vunpack.c.h.b16 %v678
    %v996 = vunpack.c.l.b16 %v679
    %v997 = vunpack.c.h.b16 %v679
    %v998 = vunpack.c.l.b16 %v680
    %v999 = vunpack.c.h.b16 %v680
    %v1000 = vunpack.c.l.b16 %v681
    %v1001 = vunpack.c.h.b16 %v681
    %v1002 = vunpack.c.l.b16 %v682
    %v1003 = vunpack.c.h.b16 %v682
    %v1004 = vunpack.c.l.b16 %v683
    %v1005 = vunpack.c.h.b16 %v683
    %v1006 = vunpack.c.l.b16 %v684
    %v1007 = vunpack.c.h.b16 %v684
    %v1008 = vunpack.c.l.b16 %v685
    %v1009 = vunpack.c.h.b16 %v685
    %v1010 = vunpack.c.l.b16 %v686
    %v1011 = vunpack.c.h.b16 %v686
    %v1012 = vunpack.c.l.b16 %v687
    %v1013 = vunpack.c.h.b16 %v687
    %v1014 = vunpack.c.l.b16 %v688
    %v1015 = vunpack.c.h.b16 %v688
    %v1016 = vunpack.c.l.b16 %v689
    %v1017 = vunpack.c.h.b16 %v689
    %v1018 = vunpack.c.l.b16 %v690
    %v1019 = vunpack.c.h.b16 %v690
    %v1020 = vunpack.c.l.b16 %v691
    %v1021 = vunpack.c.h.b16 %v691
    %v1022 = vunpack.c.l.b16 %v692
    %v1023 = vunpack.c.h.b16 %v692
    %v1024 = vunpack.c.l.b16 %v693
    %v1025 = vunpack.c.h.b16 %v693
    %v1026 = vunpack.c.l.b16 %v694
    %v1027 = vunpack.c.h.b16 %v694
    %v1028 = vunpack.c.l.b16 %v695
    %v1029 = vunpack.c.h.b16 %v695
    %v1030 = vunpack.c.l.b16 %v696
    %v1031 = vunpack.c.h.b16 %v696
    %v1032 = vunpack.c.l.b16 %v697
    %v1033 = vunpack.c.h.b16 %v697
    %v1034 = vunpack.c.l.b16 %v698
    %v1035 = vunpack.c.h.b16 %v698
    %v1036 = vunpack.c.l.b16 %v699
    %v1037 = vunpack.c.h.b16 %v699
    %v1038 = vunpack.c.l.b16 %v700
    %v1039 = vunpack.c.h.b16 %v700
    %v1040 = vunpack.c.l.b16 %v701
    %v1041 = vunpack.c.h.b16 %v701
    %v1042 = vunpack.c.l.b16 %v702
    %v1043 = vunpack.c.h.b16 %v702
    %v1044 = vunpack.c.l.b16 %v703
    %v1045 = vunpack.c.h.b16 %v703
    %v1046 = vunpack.c.l.b16 %v704
    %v1047 = vunpack.c.h.b16 %v704
    %v1048 = vunpack.c.l.b16 %v705
    %v1049 = vunpack.c.h.b16 %v705
    %v1050 = vunpack.c.l.b16 %v706
    %v1051 = vunpack.c.h.b16 %v706
    %v1052 = vunpack.c.l.b16 %v707
    %v1053 = vunpack.c.h.b16 %v707
    %v1054 = vunpack.c.l.b16 %v708
    %v1055 = vunpack.c.h.b16 %v708
    %v1056 = vunpack.c.l.b16 %v709
    %v1057 = vunpack.c.h.b16 %v709
    %v1058 = vunpack.c.l.b16 %v710
    %v1059 = vunpack.c.h.b16 %v710
    %v1060 = vunpack.c.l.b16 %v711
    %v1061 = vunpack.c.h.b16 %v711
    %v1062 = vunpack.c.l.b16 %v712
    %v1063 = vunpack.c.h.b16 %v712
    %v1064 = vunpack.c.l.b16 %v713
    %v1065 = vunpack.c.h.b16 %v713
    %v1066 = vunpack.c.l.b16 %v714
    %v1067 = vunpack.c.h.b16 %v714
    %v1068 = vunpack.c.l.b16 %v715
    %v1069 = vunpack.c.h.b16 %v715
    %v1070 = vunpack.c.l.b16 %v716
    %v1071 = vunpack.c.h.b16 %v716
    %v1072 = vunpack.c.l.b16 %v717
    %v1073 = vunpack.c.h.b16 %v717
    %v1074 = vunpack.c.l.b16 %v718
    %v1075 = vunpack.c.h.b16 %v718
    %v1076 = vunpack.c.l.b16 %v719
    %v1077 = vunpack.c.h.b16 %v719
    %v1078 = vunpack.c.l.b16 %v720
    %v1079 = vunpack.c.h.b16 %v720
    %v1080 = vunpack.c.l.b16 %v721
    %v1081 = vunpack.c.h.b16 %v721
    %v1082 = vunpack.c.l.b16 %v722
    %v1083 = vunpack.c.h.b16 %v722
    %v1084 = vunpack.c.l.b16 %v723
    %v1085 = vunpack.c.h.b16 %v723
    %v1086 = vunpack.c.l.b16 %v724
    %v1087 = vunpack.c.h.b16 %v724
    %v1088 = vunpack.c.l.b16 %v725
    %v1089 = vunpack.c.h.b16 %v725
    %v1090 = vunpack.c.l.b16 %v726
    %v1091 = vunpack.c.h.b16 %v726
    %v1092 = vunpack.c.l.b16 %v727
    %v1093 = vunpack.c.h.b16 %v727
    %v1094 = vunpack.c.l.b16 %v728
    %v1095 = vunpack.c.h.b16 %v728
    %v1096 = vunpack.c.l.b16 %v729
    %v1097 = vunpack.c.h.b16 %v729
    %v1098 = vunpack.c.l.b16 %v730
    %v1099 = vunpack.c.h.b16 %v730
    %v1100 = vunpack.c.l.b16 %v731
    %v1101 = vunpack.c.h.b16 %v731
    %v1102 = vunpack.c.l.b16 %v732
    %v1103 = vunpack.c.h.b16 %v732
    %v1104 = vunpack.c.l.b16 %v733
    %v1105 = vunpack.c.h.b16 %v733
    %v1106 = vunpack.c.l.b16 %v734
    %v1107 = vunpack.c.h.b16 %v734
    %v1108 = vunpack.c.l.b16 %v735
    %v1109 = vunpack.c.h.b16 %v735
    %v1110 = vunpack.c.l.b16 %v736
    %v1111 = vunpack.c.h.b16 %v736
    %v1112 = vunpack.c.l.b16 %v737
    %v1113 = vunpack.c.h.b16 %v737
    %v1114 = vunpack.c.l.b16 %v738
    %v1115 = vunpack.c.h.b16 %v738
    %v1116 = vunpack.c.l.b16 %v739
    %v1117 = vunpack.c.h.b16 %v739
    %v1118 = vunpack.c.l.b16 %v740
    %v1119 = vunpack.c.h.b16 %v740
    %v1120 = vunpack.c.l.b16 %v741
    %v1121 = vunpack.c.h.b16 %v741
    %v1122 = vunpack.c.l.b16 %v742
    %v1123 = vunpack.c.h.b16 %v742
    %v1124 = vunpack.c.l.b16 %v743
    %v1125 = vunpack.c.h.b16 %v743
    %v1126 = vunpack.c.l.b16 %v744
    %v1127 = vunpack.c.h.b16 %v744
    %v1128 = vunpack.c.l.b16 %v745
    %v1129 = vunpack.c.h.b16 %v745
    %v1130 = vunpack.c.l.b16 %v746
    %v1131 = vunpack.c.h.b16 %v746
    %v1132 = vunpack.c.l.b16 %v747
    %v1133 = vunpack.c.h.b16 %v747
    %v1134 = vunpack.c.l.b16 %v748
    %v1135 = vunpack.c.h.b16 %v748
    %v1136 = vunpack.c.l.b16 %v749
    %v1137 = vunpack.c.h.b16 %v749
    %v1138 = vunpack.c.l.b16 %v750
    %v1139 = vunpack.c.h.b16 %v750
    %v1140 = vunpack.c.l.b16 %v751
    %v1141 = vunpack.c.h.b16 %v751
    %v1142 = vunpack.c.l.b16 %v752
    %v1143 = vunpack.c.h.b16 %v752
    %v1144 = vunpack.c.l.b16 %v753
    %v1145 = vunpack.c.h.b16 %v753
    %v1146 = vunpack.c.l.b16 %v754
    %v1147 = vunpack.c.h.b16 %v754
    %v1148 = vunpack.c.l.b16 %v755
    %v1149 = vunpack.c.h.b16 %v755
    %v1150 = vunpack.c.l.b16 %v756
    %v1151 = vunpack.c.h.b16 %v756
    %v1152 = vunpack.c.l.b16 %v757
    %v1153 = vunpack.c.h.b16 %v757
    %v1154 = vunpack.c.l.b16 %v758
    %v1155 = vunpack.c.h.b16 %v758
    %v1156 = vunpack.c.l.b16 %v759
    %v1157 = vunpack.c.h.b16 %v759
    %v1158 = vunpack.c.l.b16 %v760
    %v1159 = vunpack.c.h.b16 %v760
    %v1160 = vunpack.c.l.b16 %v761
    %v1161 = vunpack.c.h.b16 %v761
    %v1162 = vunpack.c.l.b16 %v762
    %v1163 = vunpack.c.h.b16 %v762
    %v1164 = vunpack.c.l.b16 %v763
    %v1165 = vunpack.c.h.b16 %v763
    %v1166 = vunpack.c.l.b16 %v764
    %v1167 = vunpack.c.h.b16 %v764
    %v1168 = vunpack.c.l.b16 %v765
    %v1169 = vunpack.c.h.b16 %v765
    %v1170 = vunpack.c.l.b16 %v766
    %v1171 = vunpack.c.h.b16 %v766
    %v1172 = vunpack.c.l.b16 %v767
    %v1173 = vunpack.c.h.b16 %v767
    %v1174 = vpack.c.b16 %v922, %v918
    %v1175 = vpack.c.b16 %v923, %v919
    %v1176 = vpack.c.b16 %v924, %v920
    %v1177 = vpack.c.b16 %v925, %v921
    %v1178 = vpack.c.b16 %v930, %v926
    %v1179 = vpack.c.b16 %v931, %v927
    %v1180 = vpack.c.b16 %v932, %v928
    %v1181 = vpack.c.b16 %v933, %v929
    %v1182 = vpack.c.b16 %v938, %v934
    %v1183 = vpack.c.b16 %v939, %v935
    %v1184 = vpack.c.b16 %v940, %v936
    %v1185 = vpack.c.b16 %v941, %v937
    %v1186 = vpack.c.b16 %v946, %v942
    %v1187 = vpack.c.b16 %v947, %v943
    %v1188 = vpack.c.b16 %v948, %v944
    %v1189 = vpack.c.b16 %v949, %v945
    %v1190 = vpack.c.b16 %v954, %v950
    %v1191 = vpack.c.b16 %v955, %v951
    %v1192 = vpack.c.b16 %v956, %v952
    %v1193 = vpack.c.b16 %v957, %v953
    %v1194 = vpack.c.b16 %v962, %v958
    %v1195 = vpack.c.b16 %v963, %v959
    %v1196 = vpack.c.b16 %v964, %v960
    %v1197 = vpack.c.b16 %v965, %v961
    %v1198 = vpack.c.b16 %v970, %v966
    %v1199 = vpack.c.b16 %v971, %v967
    %v1200 = vpack.c.b16 %v972, %v968
    %v1201 = vpack.c.b16 %v973, %v969
    %v1202 = vpack.c.b16 %v978, %v974
    %v1203 = vpack.c.b16 %v979, %v975
    %v1204 = vpack.c.b16 %v980, %v976
    %v1205 = vpack.c.b16 %v981, %v977
    %v1206 = vpack.c.b16 %v986, %v982
    %v1207 = vpack.c.b16 %v987, %v983
    %v1208 = vpack.c.b16 %v988, %v984
    %v1209 = vpack.c.b16 %v989, %v985
    %v1210 = vpack.c.b16 %v994, %v990
    %v1211 = vpack.c.b16 %v995, %v991
    %v1212 = vpack.c.b16 %v996, %v992
    %v1213 = vpack.c.b16 %v997, %v993
    %v1214 = vpack.c.b16 %v1002, %v998
    %v1215 = vpack.c.b16 %v1003, %v999
    %v1216 = vpack.c.b16 %v1004, %v1000
    %v1217 = vpack.c.b16 %v1005, %v1001
    %v1218 = vpack.c.b16 %v1010, %v1006
    %v1219 = vpack.c.b16 %v1011, %v1007
    %v1220 = vpack.c.b16 %v1012, %v1008
    %v1221 = vpack.c.b16 %v1013, %v1009
    %v1222 = vpack.c.b16 %v1018, %v1014
    %v1223 = vpack.c.b16 %v1019, %v1015
    %v1224 = vpack.c.b16 %v1020, %v1016
    %v1225 = vpack.c.b16 %v1021, %v1017
    %v1226 = vpack.c.b16 %v1026, %v1022
    %v1227 = vpack.c.b16 %v1027, %v1023
    %v1228 = vpack.c.b16 %v1028, %v1024
    %v1229 = vpack.c.b16 %v1029, %v1025
    %v1230 = vpack.c.b16 %v1034, %v1030
    %v1231 = vpack.c.b16 %v1035, %v1031
    %v1232 = vpack.c.b16 %v1036, %v1032
    %v1233 = vpack.c.b16 %v1037, %v1033
    %v1234 = vpack.c.b16 %v1042, %v1038
    %v1235 = vpack.c.b16 %v1043, %v1039
    %v1236 = vpack.c.b16 %v1044, %v1040
    %v1237 = vpack.c.b16 %v1045, %v1041
    %v1238 = vpack.c.b16 %v1050, %v1046
    %v1239 = vpack.c.b16 %v1051, %v1047
    %v1240 = vpack.c.b16 %v1052, %v1048
    %v1241 = vpack.c.b16 %v1053, %v1049
    %v1242 = vpack.c.b16 %v1058, %v1054
    %v1243 = vpack.c.b16 %v1059, %v1055
    %v1244 = vpack.c.b16 %v1060, %v1056
    %v1245 = vpack.c.b16 %v1061, %v1057
    %v1246 = vpack.c.b16 %v1066, %v1062
    %v1247 = vpack.c.b16 %v1067, %v1063
    %v1248 = vpack.c.b16 %v1068, %v1064
    %v1249 = vpack.c.b16 %v1069, %v1065
    %v1250 = vpack.c.b16 %v1074, %v1070
    %v1251 = vpack.c.b16 %v1075, %v1071
    %v1252 = vpack.c.b16 %v1076, %v1072
    %v1253 = vpack.c.b16 %v1077, %v1073
    %v1254 = vpack.c.b16 %v1082, %v1078
    %v1255 = vpack.c.b16 %v1083, %v1079
    %v1256 = vpack.c.b16 %v1084, %v1080
    %v1257 = vpack.c.b16 %v1085, %v1081
    %v1258 = vpack.c.b16 %v1090, %v1086
    %v1259 = vpack.c.b16 %v1091, %v1087
    %v1260 = vpack.c.b16 %v1092, %v1088
    %v1261 = vpack.c.b16 %v1093, %v1089
    %v1262 = vpack.c.b16 %v1098, %v1094
    %v1263 = vpack.c.b16 %v1099, %v1095
    %v1264 = vpack.c.b16 %v1100, %v1096
    %v1265 = vpack.c.b16 %v1101, %v1097
    %v1266 = vpack.c.b16 %v1106, %v1102
    %v1267 = vpack.c.b16 %v1107, %v1103
    %v1268 = vpack.c.b16 %v1108, %v1104
    %v1269 = vpack.c.b16 %v1109, %v1105
    %v1270 = vpack.c.b16 %v1114, %v1110
    %v1271 = vpack.c.b16 %v1115, %v1111
    %v1272 = vpack.c.b16 %v1116, %v1112
    %v1273 = vpack.c.b16 %v1117, %v1113
    %v1274 = vpack.c.b16 %v1122, %v1118
    %v1275 = vpack.c.b16 %v1123, %v1119
    %v1276 = vpack.c.b16 %v1124, %v1120
    %v1277 = vpack.c.b16 %v1125, %v1121
    %v1278 = vpack.c.b16 %v1130, %v1126
    %v1279 = vpack.c.b16 %v1131, %v1127
    %v1280 = vpack.c.b16 %v1132, %v1128
    %v1281 = vpack.c.b16 %v1133, %v1129
    %v1282 = vpack.c.b16 %v1138, %v1134
    %v1283 = vpack.c.b16 %v1139, %v1135
    %v1284 = vpack.c.b16 %v1140, %v1136
    %v1285 = vpack.c.b16 %v1141, %v1137
    %v1286 = vpack.c.b16 %v1146, %v1142
    %v1287 = vpack.c.b16 %v1147, %v1143
    %v1288 = vpack.c.b16 %v1148, %v1144
    %v1289 = vpack.c.b16 %v1149, %v1145
    %v1290 = vpack.c.b16 %v1154, %v1150
    %v1291 = vpack.c.b16 %v1155, %v1151
    %v1292 = vpack.c.b16 %v1156, %v1152
    %v1293 = vpack.c.b16 %v1157, %v1153
    %v1294 = vpack.c.b16 %v1162, %v1158
    %v1295 = vpack.c.b16 %v1163, %v1159
    %v1296 = vpack.c.b16 %v1164, %v1160
    %v1297 = vpack.c.b16 %v1165, %v1161
    %v1298 = vpack.c.b16 %v1170, %v1166
    %v1299 = vpack.c.b16 %v1171, %v1167
    %v1300 = vpack.c.b16 %v1172, %v1168
    %v1301 = vpack.c.b16 %v1173, %v1169
    %1430 = vmatprep.subr.bf16.mxu0 %v1203
    %1431 = vmatpush1.bf16.msra.mxu0 %v1202
    %1432 = vmatprep.subr.bf16.mxu0 %v1199
    %1433 = vmatpush1.bf16.msra.mxu0 %v1198
    %1434 = vmatprep.subr.bf16.mxu0 %v1195
    %1435 = vmatpush1.bf16.msra.mxu0 %v1194
    %1436 = vmatprep.subr.bf16.mxu0 %v1191
    %1437 = vmatpush1.bf16.msra.mxu0 %v1190
    %1438 = vmatprep.subr.bf16.mxu0 %v1187
    %1439 = vmatpush1.bf16.msra.mxu0 %v1186
    %1440 = vmatprep.subr.bf16.mxu0 %v1183
    %1441 = vmatpush1.bf16.msra.mxu0 %v1182
    %1442 = vmatprep.subr.bf16.mxu0 %v1179
    %1443 = vmatpush1.bf16.msra.mxu0 %v1178
    %1444 = vmatprep.subr.bf16.mxu0 %v1175
    %1445 = vmatpush1.bf16.msra.mxu0 %v1174
    %1446 = vmatprep.subr.bf16.mxu0 %v1235
    %1447 = vmatpush2.bf16.msra.mxu0 %v1234
    %1448 = vmatprep.subr.bf16.mxu0 %v1231
    %1449 = vmatpush2.bf16.msra.mxu0 %v1230
    %1450 = vmatprep.subr.bf16.mxu0 %v1227
    %1451 = vmatpush2.bf16.msra.mxu0 %v1226
    %1452 = vmatprep.subr.bf16.mxu0 %v1223
    %1453 = vmatpush2.bf16.msra.mxu0 %v1222
    %1454 = vmatprep.subr.bf16.mxu0 %v1219
    %1455 = vmatpush2.bf16.msra.mxu0 %v1218
    %1456 = vmatprep.subr.bf16.mxu0 %v1215
    %1457 = vmatpush2.bf16.msra.mxu0 %v1214
    %1458 = vmatprep.subr.bf16.mxu0 %v1211
    %1459 = vmatpush2.bf16.msra.mxu0 %v1210
    %1460 = vmatprep.subr.bf16.mxu0 %v1207
    %1461 = vmatpush2.bf16.msra.mxu0 %v1206
    %1462 = vmatprep.mubr.bf16.mxu0 %v637
    %1463 = vmatmul.mubr.bf16.gmra.mxu0 %v636
    %v1464 = vpop.f32.mrf.mxu0
    %v1465 = vadd.f32 %v773, %v1464
    %v1466 = vpop.f32.mrf.mxu0
    %v1467 = vadd.f32 %v777, %v1466
    %v1468 = vpop.f32.mrf.mxu0
    %v1469 = vadd.f32 %v773, %v1468
    %v1470 = vpop.f32.mrf.mxu0
    %v1471 = vadd.f32 %v777, %v1470
    %1472 = vdwg.mxu0
    %1473 = vmatprep.subr.bf16.mxu0 %v1267
    %1474 = vmatpush1.bf16.msra.mxu0 %v1266
    %1475 = vmatprep.subr.bf16.mxu0 %v1263
    %1476 = vmatpush1.bf16.msra.mxu0 %v1262
    %1477 = vmatprep.subr.bf16.mxu0 %v1259
    %1478 = vmatpush1.bf16.msra.mxu0 %v1258
    %1479 = vmatprep.subr.bf16.mxu0 %v1255
    %1480 = vmatpush1.bf16.msra.mxu0 %v1254
    %1481 = vmatprep.subr.bf16.mxu0 %v1251
    %1482 = vmatpush1.bf16.msra.mxu0 %v1250
    %1483 = vmatprep.subr.bf16.mxu0 %v1247
    %1484 = vmatpush1.bf16.msra.mxu0 %v1246
    %1485 = vmatprep.subr.bf16.mxu0 %v1243
    %1486 = vmatpush1.bf16.msra.mxu0 %v1242
    %1487 = vmatprep.subr.bf16.mxu0 %v1239
    %1488 = vmatpush1.bf16.msra.mxu0 %v1238
    %1489 = vmatprep.subr.bf16.mxu0 %v1299
    %1490 = vmatpush2.bf16.msra.mxu0 %v1298
    %1491 = vmatprep.subr.bf16.mxu0 %v1295
    %1492 = vmatpush2.bf16.msra.mxu0 %v1294
    %1493 = vmatprep.subr.bf16.mxu0 %v1291
    %1494 = vmatpush2.bf16.msra.mxu0 %v1290
    %1495 = vmatprep.subr.bf16.mxu0 %v1287
    %1496 = vmatpush2.bf16.msra.mxu0 %v1286
    %1497 = vmatprep.subr.bf16.mxu0 %v1283
    %1498 = vmatpush2.bf16.msra.mxu0 %v1282
    %1499 = vmatprep.subr.bf16.mxu0 %v1279
    %1500 = vmatpush2.bf16.msra.mxu0 %v1278
    %1501 = vmatprep.subr.bf16.mxu0 %v1275
    %1502 = vmatpush2.bf16.msra.mxu0 %v1274
    %1503 = vmatprep.subr.bf16.mxu0 %v1271
    %1504 = vmatpush2.bf16.msra.mxu0 %v1270
    %1505 = vmatprep.mubr.bf16.mxu0 %v639
    %1506 = vmatmul.mubr.bf16.gmra.mxu0 %v638
    %v1507 = vpop.f32.mrf.mxu0
    %v1508 = vadd.f32 %v1465, %v1507
    %v1509 = vpop.f32.mrf.mxu0
    %v1510 = vadd.f32 %v1467, %v1509
    %v1511 = vpop.f32.mrf.mxu0
    %v1512 = vadd.f32 %v1469, %v1511
    %v1513 = vpop.f32.mrf.mxu0
    %v1514 = vadd.f32 %v1471, %v1513
    %1515 = vdwg.mxu0
    %1516 = vmatprep.subr.bf16.mxu0 %v1205
    %1517 = vmatpush1.bf16.msra.mxu0 %v1204
    %1518 = vmatprep.subr.bf16.mxu0 %v1201
    %1519 = vmatpush1.bf16.msra.mxu0 %v1200
    %1520 = vmatprep.subr.bf16.mxu0 %v1197
    %1521 = vmatpush1.bf16.msra.mxu0 %v1196
    %1522 = vmatprep.subr.bf16.mxu0 %v1193
    %1523 = vmatpush1.bf16.msra.mxu0 %v1192
    %1524 = vmatprep.subr.bf16.mxu0 %v1189
    %1525 = vmatpush1.bf16.msra.mxu0 %v1188
    %1526 = vmatprep.subr.bf16.mxu0 %v1185
    %1527 = vmatpush1.bf16.msra.mxu0 %v1184
    %1528 = vmatprep.subr.bf16.mxu0 %v1181
    %1529 = vmatpush1.bf16.msra.mxu0 %v1180
    %1530 = vmatprep.subr.bf16.mxu0 %v1177
    %1531 = vmatpush1.bf16.msra.mxu0 %v1176
    %1532 = vmatprep.subr.bf16.mxu0 %v1237
    %1533 = vmatpush2.bf16.msra.mxu0 %v1236
    %1534 = vmatprep.subr.bf16.mxu0 %v1233
    %1535 = vmatpush2.bf16.msra.mxu0 %v1232
    %1536 = vmatprep.subr.bf16.mxu0 %v1229
    %1537 = vmatpush2.bf16.msra.mxu0 %v1228
    %1538 = vmatprep.subr.bf16.mxu0 %v1225
    %1539 = vmatpush2.bf16.msra.mxu0 %v1224
    %1540 = vmatprep.subr.bf16.mxu0 %v1221
    %1541 = vmatpush2.bf16.msra.mxu0 %v1220
    %1542 = vmatprep.subr.bf16.mxu0 %v1217
    %1543 = vmatpush2.bf16.msra.mxu0 %v1216
    %1544 = vmatprep.subr.bf16.mxu0 %v1213
    %1545 = vmatpush2.bf16.msra.mxu0 %v1212
    %1546 = vmatprep.subr.bf16.mxu0 %v1209
    %1547 = vmatpush2.bf16.msra.mxu0 %v1208
    %1548 = vmatprep.mubr.bf16.mxu0 %v637
    %1549 = vmatmul.mubr.bf16.gmra.mxu0 %v636
    %v1550 = vpop.f32.mrf.mxu0
    %v1551 = vadd.f32 %v781, %v1550
    %v1552 = vpop.f32.mrf.mxu0
    %v1553 = vadd.f32 %v785, %v1552
    %v1554 = vpop.f32.mrf.mxu0
    %v1555 = vadd.f32 %v781, %v1554
    %v1556 = vpop.f32.mrf.mxu0
    %v1557 = vadd.f32 %v785, %v1556
    %1558 = vdwg.mxu0
    %1559 = vmatprep.subr.bf16.mxu0 %v1269
    %1560 = vmatpush1.bf16.msra.mxu0 %v1268
    %1561 = vmatprep.subr.bf16.mxu0 %v1265
    %1562 = vmatpush1.bf16.msra.mxu0 %v1264
    %1563 = vmatprep.subr.bf16.mxu0 %v1261
    %1564 = vmatpush1.bf16.msra.mxu0 %v1260
    %1565 = vmatprep.subr.bf16.mxu0 %v1257
    %1566 = vmatpush1.bf16.msra.mxu0 %v1256
    %1567 = vmatprep.subr.bf16.mxu0 %v1253
    %1568 = vmatpush1.bf16.msra.mxu0 %v1252
    %1569 = vmatprep.subr.bf16.mxu0 %v1249
    %1570 = vmatpush1.bf16.msra.mxu0 %v1248
    %1571 = vmatprep.subr.bf16.mxu0 %v1245
    %1572 = vmatpush1.bf16.msra.mxu0 %v1244
    %1573 = vmatprep.subr.bf16.mxu0 %v1241
    %1574 = vmatpush1.bf16.msra.mxu0 %v1240
    %1575 = vmatprep.subr.bf16.mxu0 %v1301
    %1576 = vmatpush2.bf16.msra.mxu0 %v1300
    %1577 = vmatprep.subr.bf16.mxu0 %v1297
    %1578 = vmatpush2.bf16.msra.mxu0 %v1296
    %1579 = vmatprep.subr.bf16.mxu0 %v1293
    %1580 = vmatpush2.bf16.msra.mxu0 %v1292
    %1581 = vmatprep.subr.bf16.mxu0 %v1289
    %1582 = vmatpush2.bf16.msra.mxu0 %v1288
    %1583 = vmatprep.subr.bf16.mxu0 %v1285
    %1584 = vmatpush2.bf16.msra.mxu0 %v1284
    %1585 = vmatprep.subr.bf16.mxu0 %v1281
    %1586 = vmatpush2.bf16.msra.mxu0 %v1280
    %1587 = vmatprep.subr.bf16.mxu0 %v1277
    %1588 = vmatpush2.bf16.msra.mxu0 %v1276
    %1589 = vmatprep.subr.bf16.mxu0 %v1273
    %1590 = vmatpush2.bf16.msra.mxu0 %v1272
    %1591 = vmatprep.mubr.bf16.mxu0 %v639
    %1592 = vmatmul.mubr.bf16.gmra.mxu0 %v638
    %v1593 = vpop.f32.mrf.mxu0
    %v1594 = vadd.f32 %v1551, %v1593
    %v1595 = vpop.f32.mrf.mxu0
    %v1596 = vadd.f32 %v1553, %v1595
    %v1597 = vpop.f32.mrf.mxu0
    %v1598 = vadd.f32 %v1555, %v1597
    %v1599 = vpop.f32.mrf.mxu0
    %v1600 = vadd.f32 %v1557, %v1599
    %1601 = vdwg.mxu0
    %v1602 = vsub.f32 0.0, %v1508
    %v1603 = vsub.f32 0.0, %v1510
    %v1604 = vsub.f32 0.0, %v1594
    %v1605 = vsub.f32 0.0, %v1596
    %v1606 = vsub.f32 0.0, %v1512
    %v1607 = vsub.f32 0.0, %v1514
    %v1608 = vsub.f32 0.0, %v1598
    %v1609 = vsub.f32 0.0, %v1600
    %v1610 = vmul.f32 %v1602, 1.442695
    %v1611 = vpow.pop %v1610
    %v1612 = vmul.f32 %v1603, 1.442695
    %v1613 = vpow.pop %v1612
    %v1614 = vmul.f32 %v1604, 1.442695
    %v1615 = vpow.pop %v1614
    %v1616 = vmul.f32 %v1605, 1.442695
    %v1617 = vpow.pop %v1616
    %v1618 = vmul.f32 %v1606, 1.442695
    %v1619 = vpow.pop %v1618
    %v1620 = vmul.f32 %v1607, 1.442695
    %v1621 = vpow.pop %v1620
    %v1622 = vmul.f32 %v1608, 1.442695
    %v1623 = vpow.pop %v1622
    %v1624 = vmul.f32 %v1609, 1.442695
    %v1625 = vpow.pop %v1624
    %v1626 = vadd.f32 %v1611, 1.0
    %v1627 = vadd.f32 %v1613, 1.0
    %v1628 = vadd.f32 %v1615, 1.0
    %v1629 = vadd.f32 %v1617, 1.0
    %v1630 = vadd.f32 %v1619, 1.0
    %v1631 = vadd.f32 %v1621, 1.0
    %v1632 = vadd.f32 %v1623, 1.0
    %v1633 = vadd.f32 %v1625, 1.0
    %v1634 = vrcp.pop %v1626
    %v1635 = vrcp.pop %v1627
    %v1636 = vrcp.pop %v1628
    %v1637 = vrcp.pop %v1629
    %v1638 = vrcp.pop %v1630
    %v1639 = vrcp.pop %v1631
    %v1640 = vrcp.pop %v1632
    %v1641 = vrcp.pop %v1633
    %v1642 = vmul.f32 %v1508, %v1634
    %v1643 = vmul.f32 %v1510, %v1635
    %v1644 = vmul.f32 %v1594, %v1636
    %v1645 = vmul.f32 %v1596, %v1637
    %v1646 = vmul.f32 %v1512, %v1638
    %v1647 = vmul.f32 %v1514, %v1639
    %v1648 = vmul.f32 %v1598, %v1640
    %v1649 = vmul.f32 %v1600, %v1641
    %1650 = vst [vmem:[#allocation7] sm:$0xff] %v1642
    %1651 = vst [vmem:[#allocation7 + $0x8] sm:$0xff] %v1643
    %1652 = vst [vmem:[#allocation7 + $0x10] sm:$0xff] %v1644
    %1653 = vst [vmem:[#allocation7 + $0x18] sm:$0xff] %v1645
    %1654 = vst [vmem:[#allocation7 + $0x20] sm:$0xff] %v1646
    %1655 = vst [vmem:[#allocation7 + $0x28] sm:$0xff] %v1647
    %1656 = vst [vmem:[#allocation7 + $0x30] sm:$0xff] %v1648
    %1657 = vst [vmem:[#allocation7 + $0x38] sm:$0xff] %v1649
    // Predicated region
    $region34: #{tpu_custom_call.1} parent=1 // pred_check
      _
    $region35: #{tpu_custom_call.1} parent=1 // pred_check_branch
      %1659 = sbr.rel (0) target = $region37
    $region36: #{tpu_custom_call.1} parent=1 // pred_region
      %s1661 = ssub.s32 1024, 1024
      %1662 = vsyncadd [#allocation4], %s1661
      %s1663 = sshll.u32 [#allocation7], 4
      %s1664 = int_to_ptr.vmem [resolvable:$true] %s1663
      %1669 = dma.vmem_to_hbm [thread:$0]  %s1664, 1024, %s6, [#allocation4], 512, 512, 32
    $region37: #{tpu_custom_call.1} parent=1 // pred_fallthru
      _
    // Predicated region
    $region38: #{tpu_custom_call.1} parent=1 // pred_check
      _
    $region39: #{tpu_custom_call.1} parent=1 // pred_check_branch
      %1671 = sbr.rel (0) target = $region41
    $region40: #{tpu_custom_call.1} parent=1 // pred_region
      %1672 = dma.done [#allocation4], 1024
    $region41: #{tpu_custom_call.1} parent=1 // pred_fallthru
      _
    %1673 = vsyncpa [#allocation3], 1
    %1674 = vsyncpa [#allocation6], 1
    %1675 = vsyncpa [#allocation4], 1

</llo_original>
